<compile_context>
chip_gen: v7x
topology: tpu7x:2x2x1
jax: 0.10.0
libtpu: 0.0.40
codegen_flags: <defaults>
</compile_context>

<pallas_src>
import jax
import jax.numpy as jnp
from jax.experimental import pallas as pl
from jax.experimental.pallas import tpu as pltpu

LN_EPS = 1e-5  # torch.nn.LayerNorm default


def _round_up(n, m):
    return ((n + m - 1) // m) * m


def _layernorm(h, gamma, beta):
    mu = jnp.mean(h, axis=-1, keepdims=True)
    d = h - mu
    var = jnp.mean(d * d, axis=-1, keepdims=True)
    return d * jax.lax.rsqrt(var + LN_EPS) * gamma + beta


def seffnet_kernel(
    x_ref,
    w_se1_ref, w_se2_ref,                 # SELayer weights (no bias)
    w_f1_ref, b_f1_ref, g1_ref, be1_ref,  # Linear + LayerNorm (D/4)
    w_f2_ref, b_f2_ref, g2_ref, be2_ref,  # Linear + LayerNorm (D/16)
    w_f3_ref, b_f3_ref,                   # final Linear (columns zero-padded to 128k)
    out_ref,
):
    x = x_ref[...]

    # --- SELayer: gate = sigmoid(relu(x @ W1) @ W2); out = gate * x ---
    h = jnp.maximum(
        jnp.dot(x, w_se1_ref[...], preferred_element_type=jnp.float32), 0.0
    )
    gate = jax.nn.sigmoid(
        jnp.dot(h, w_se2_ref[...], preferred_element_type=jnp.float32)
    )
    a = gate * x

    # --- FF block 1: Dropout(p=0) is identity; Linear -> LayerNorm -> ReLU ---
    h1 = jnp.dot(a, w_f1_ref[...], preferred_element_type=jnp.float32) + b_f1_ref[...]
    h1 = jnp.maximum(_layernorm(h1, g1_ref[...], be1_ref[...]), 0.0)

    # --- FF block 2: Linear -> LayerNorm -> ReLU ---
    h2 = jnp.dot(h1, w_f2_ref[...], preferred_element_type=jnp.float32) + b_f2_ref[...]
    h2 = jnp.maximum(_layernorm(h2, g2_ref[...], be2_ref[...]), 0.0)

    # --- final Linear (lane-dense padded output) ---
    out_ref[...] = (
        jnp.dot(h2, w_f3_ref[...], preferred_element_type=jnp.float32) + b_f3_ref[...]
    ).astype(out_ref.dtype)


@jax.jit
def seffnet_forward(x, params):
    B, D = x.shape
    d_half, d4, d16 = D // 2, D // 4, D // 16
    out_dim = params["w_f3"].shape[1]

    # Lane-dense output: zero-pad final Linear columns to a multiple of 128.
    out_pad = _round_up(out_dim, 128)
    w_f3 = jnp.pad(params["w_f3"], ((0, 0), (0, out_pad - out_dim)))
    b_f3 = jnp.pad(params["b_f3"], ((0, 0), (0, out_pad - out_dim)))

    # Batch tiling: sublane-aligned tile (up to 512 rows), pad rows and slice
    # them off after.  Zero pad rows are harmless through LayerNorm (var=0 ->
    # rsqrt(eps), finite) and are discarded.
    TB = min(512, _round_up(B, 8))
    B_pad = _round_up(B, TB)
    x_p = jnp.pad(x, ((0, B_pad - B), (0, 0)))

    weights = (
        params["w_se1"], params["w_se2"],
        params["w_f1"], params["b_f1"], params["g1"], params["be1"],
        params["w_f2"], params["b_f2"], params["g2"], params["be2"],
        w_f3, b_f3,
    )

    # All weights / LN params are 2-D and VMEM-resident across all grid steps
    # (constant index_map -> no re-DMA between steps).
    def resident_spec(a):
        return pl.BlockSpec(a.shape, lambda i: (0, 0))

    in_specs = [pl.BlockSpec((TB, D), lambda i: (i, 0))]
    in_specs += [resident_spec(a) for a in weights]
    out_specs = pl.BlockSpec((TB, out_pad), lambda i: (i, 0))

    # Explicit VMEM budget: resident weights + double-buffered activation tiles,
    # with generous headroom, capped below v7x physical VMEM.
    weight_bytes = sum(a.size * a.dtype.itemsize for a in weights)
    act_bytes = 2 * 2 * TB * (D + out_pad) * 4  # x + out tiles, double-buffered
    vmem_limit = int(min(60 * 1024 * 1024,
                         max(4 * 1024 * 1024, 3 * (weight_bytes + act_bytes))))

    # Advisory cost hint so XLA's scheduler overlaps neighbors sensibly.
    matmul_flops = 2 * B_pad * (
        D * d_half + d_half * D + D * d4 + d4 * d16 + d16 * out_pad
    )
    cost = pl.CostEstimate(
        flops=matmul_flops,
        transcendentals=B_pad * (D + d4 + d16),   # sigmoid exp + 2x rsqrt
        bytes_accessed=(x_p.size + B_pad * out_pad) * 4 + weight_bytes,
    )

    # TODO(synk): for very large D on v7x (64 MiB VMEM), stream w_se1 / w_f1 in
    # K-tiles with an accumulator instead of keeping all weights resident.
    # TODO(synk): optional bf16 weight storage (v6e MXU path) not enabled here
    # to keep bit-level parity with the f32 PyTorch module.
    out_p = pl.pallas_call(
        seffnet_kernel,
        out_shape=jax.ShapeDtypeStruct((B_pad, out_pad), jnp.float32),
        grid_spec=pltpu.PrefetchScalarGridSpec(
            num_scalar_prefetch=0,
            grid=(B_pad // TB,),
            in_specs=in_specs,
            out_specs=out_specs,
        ),
        compiler_params=pltpu.CompilerParams(
            dimension_semantics=("parallel",),
            vmem_limit_bytes=vmem_limit,
        ),
        cost_estimate=cost,
    )(x_p, *weights)

    return out_p[:B, :out_dim]


def init_params(key, input_shape, output_shape):
    d = input_shape
    d_half, d4, d16 = d // 2, d // 4, d // 16
    ks = jax.random.split(key, 8)
    scale = 0.1
    return {
        # SELayer (bias=False)
        "w_se1": scale * jax.random.normal(ks[0], (d, d_half), jnp.float32),
        "w_se2": scale * jax.random.normal(ks[1], (d_half, d), jnp.float32),
        # FF Linear 1 + LayerNorm(d/4)
        "w_f1": scale * jax.random.normal(ks[2], (d, d4), jnp.float32),
        "b_f1": scale * jax.random.normal(ks[3], (1, d4), jnp.float32),
        "g1": jnp.ones((1, d4), jnp.float32),
        "be1": jnp.zeros((1, d4), jnp.float32),
        # FF Linear 2 + LayerNorm(d/16)
        "w_f2": scale * jax.random.normal(ks[4], (d4, d16), jnp.float32),
        "b_f2": scale * jax.random.normal(ks[5], (1, d16), jnp.float32),
        "g2": jnp.ones((1, d16), jnp.float32),
        "be2": jnp.zeros((1, d16), jnp.float32),
        # final Linear
        "w_f3": scale * jax.random.normal(ks[6], (d16, output_shape), jnp.float32),
        "b_f3": scale * jax.random.normal(ks[7], (1, output_shape), jnp.float32),
    }


def reference_forward(x, p):
    h = jnp.maximum(x @ p["w_se1"], 0.0)
    a = jax.nn.sigmoid(h @ p["w_se2"]) * x

    def ln(h, g, b):
        mu = jnp.mean(h, axis=-1, keepdims=True)
        var = jnp.mean((h - mu) ** 2, axis=-1, keepdims=True)
        return (h - mu) / jnp.sqrt(var + LN_EPS) * g + b

    h1 = jnp.maximum(ln(a @ p["w_f1"] + p["b_f1"], p["g1"], p["be1"]), 0.0)
    h2 = jnp.maximum(ln(h1 @ p["w_f2"] + p["b_f2"], p["g2"], p["be2"]), 0.0)
    return h2 @ p["w_f3"] + p["b_f3"]


if __name__ == "__main__":
    # TODO(synk): Dropout with p>0 (training mode) not implemented; default
    # dropout_rate=0.0 makes it an identity, which is what we reproduce.
    INPUT_SHAPE = 64       # must be divisible by 16 (uses D/2, D/4, D/16)
    OUTPUT_SHAPE = 8
    BATCH = 200            # non-multiple of 8*128 tiles: exercises pad+slice

    key = jax.random.PRNGKey(0)
    k_x, k_p = jax.random.split(key)
    x = jax.random.normal(k_x, (BATCH, INPUT_SHAPE), jnp.float32)
    params = init_params(k_p, INPUT_SHAPE, OUTPUT_SHAPE)

    out = seffnet_forward(x, params)
    jax.block_until_ready(out)

    ref = reference_forward(x, params)
    assert out.shape == (BATCH, OUTPUT_SHAPE)
    assert jnp.allclose(out, ref, atol=1e-4, rtol=1e-4), "mismatch vs reference"
    print("KERNEL_OK")
</pallas_src>

<mosaic_0001>
module attributes {stable_mosaic.version = 11 : i64} {
  func.func @seffnet_kernel(%arg0: i32, %arg1: memref<200x64xf32, #tpu.memory_space<vmem>>, %arg2: memref<64x32xf32, #tpu.memory_space<vmem>>, %arg3: memref<32x64xf32, #tpu.memory_space<vmem>>, %arg4: memref<64x16xf32, #tpu.memory_space<vmem>>, %arg5: memref<1x16xf32, #tpu.memory_space<vmem>>, %arg6: memref<1x16xf32, #tpu.memory_space<vmem>>, %arg7: memref<1x16xf32, #tpu.memory_space<vmem>>, %arg8: memref<16x4xf32, #tpu.memory_space<vmem>>, %arg9: memref<1x4xf32, #tpu.memory_space<vmem>>, %arg10: memref<1x4xf32, #tpu.memory_space<vmem>>, %arg11: memref<1x4xf32, #tpu.memory_space<vmem>>, %arg12: memref<4x128xf32, #tpu.memory_space<vmem>>, %arg13: memref<1x128xf32, #tpu.memory_space<vmem>>, %arg14: memref<200x128xf32, #tpu.memory_space<vmem>>) attributes {dimension_semantics = [#tpu.dimension_semantics<parallel>], iteration_bounds = array<i64: 1>, scalar_prefetch = 0 : i64, scratch_operands = 0 : i64, tpu.core_type = #tpu.core_type<tc>, window_params = [{transform_indices = @transform_0, window_bounds = array<i64: 200, 64>}, {pipeline_mode = #tpu.pipeline_mode<synchronous>, transform_indices = @transform_1, window_bounds = array<i64: 64, 32>}, {pipeline_mode = #tpu.pipeline_mode<synchronous>, transform_indices = @transform_2, window_bounds = array<i64: 32, 64>}, {pipeline_mode = #tpu.pipeline_mode<synchronous>, transform_indices = @transform_3, window_bounds = array<i64: 64, 16>}, {pipeline_mode = #tpu.pipeline_mode<synchronous>, transform_indices = @transform_4, window_bounds = array<i64: 1, 16>}, {pipeline_mode = #tpu.pipeline_mode<synchronous>, transform_indices = @transform_5, window_bounds = array<i64: 1, 16>}, {pipeline_mode = #tpu.pipeline_mode<synchronous>, transform_indices = @transform_6, window_bounds = array<i64: 1, 16>}, {pipeline_mode = #tpu.pipeline_mode<synchronous>, transform_indices = @transform_7, window_bounds = array<i64: 16, 4>}, {pipeline_mode = #tpu.pipeline_mode<synchronous>, transform_indices = @transform_8, window_bounds = array<i64: 1, 4>}, {pipeline_mode = #tpu.pipeline_mode<synchronous>, transform_indices = @transform_9, window_bounds = array<i64: 1, 4>}, {pipeline_mode = #tpu.pipeline_mode<synchronous>, transform_indices = @transform_10, window_bounds = array<i64: 1, 4>}, {pipeline_mode = #tpu.pipeline_mode<synchronous>, transform_indices = @transform_11, window_bounds = array<i64: 4, 128>}, {pipeline_mode = #tpu.pipeline_mode<synchronous>, transform_indices = @transform_12, window_bounds = array<i64: 1, 128>}, {transform_indices = @transform_13, window_bounds = array<i64: 200, 128>}]} {
    %c0 = arith.constant 0 : index
    %c0_0 = arith.constant 0 : index
    %0 = vector.load %arg1[%c0, %c0_0] : memref<200x64xf32, #tpu.memory_space<vmem>>, vector<200x64xf32>
    %c0_1 = arith.constant 0 : index
    %c0_2 = arith.constant 0 : index
    %1 = vector.load %arg2[%c0_1, %c0_2] : memref<64x32xf32, #tpu.memory_space<vmem>>, vector<64x32xf32>
    %cst = arith.constant dense<0.000000e+00> : vector<200x32xf32>
    %2 = tpu.matmul %0, %1, %cst {dimension_numbers = #tpu.dot_dimension_numbers<[1], [0], [0], [1], [0, 0, 1, 1], [], []>} : vector<200x64xf32>, vector<64x32xf32>, vector<200x32xf32> -> vector<200x32xf32>
    %cst_3 = arith.constant 0.000000e+00 : f32
    %3 = vector.broadcast %cst_3 : f32 to vector<200x32xf32>
    %4 = arith.maximumf %2, %3 : vector<200x32xf32>
    %c0_4 = arith.constant 0 : index
    %c0_5 = arith.constant 0 : index
    %5 = vector.load %arg3[%c0_4, %c0_5] : memref<32x64xf32, #tpu.memory_space<vmem>>, vector<32x64xf32>
    %cst_6 = arith.constant dense<0.000000e+00> : vector<200x64xf32>
    %6 = tpu.matmul %4, %5, %cst_6 {dimension_numbers = #tpu.dot_dimension_numbers<[1], [0], [0], [1], [0, 0, 1, 1], [], []>} : vector<200x32xf32>, vector<32x64xf32>, vector<200x64xf32> -> vector<200x64xf32>
    %7 = arith.negf %6 : vector<200x64xf32>
    %8 = math.exp %7 : vector<200x64xf32>
    %cst_7 = arith.constant 1.000000e+00 : f32
    %9 = vector.broadcast %cst_7 : f32 to vector<200x64xf32>
    %10 = arith.addf %9, %8 : vector<200x64xf32>
    %11 = arith.divf %9, %10 : vector<200x64xf32>
    %12 = arith.mulf %11, %0 : vector<200x64xf32>
    %c0_8 = arith.constant 0 : index
    %c0_9 = arith.constant 0 : index
    %13 = vector.load %arg4[%c0_8, %c0_9] : memref<64x16xf32, #tpu.memory_space<vmem>>, vector<64x16xf32>
    %cst_10 = arith.constant dense<0.000000e+00> : vector<200x16xf32>
    %14 = tpu.matmul %12, %13, %cst_10 {dimension_numbers = #tpu.dot_dimension_numbers<[1], [0], [0], [1], [0, 0, 1, 1], [], []>} : vector<200x64xf32>, vector<64x16xf32>, vector<200x16xf32> -> vector<200x16xf32>
    %c0_11 = arith.constant 0 : index
    %c0_12 = arith.constant 0 : index
    %15 = vector.load %arg5[%c0_11, %c0_12] : memref<1x16xf32, #tpu.memory_space<vmem>>, vector<1x16xf32>
    %16 = vector.broadcast %15 : vector<1x16xf32> to vector<200x16xf32>
    %17 = arith.addf %14, %16 : vector<200x16xf32>
    %c0_13 = arith.constant 0 : index
    %c0_14 = arith.constant 0 : index
    %18 = vector.load %arg6[%c0_13, %c0_14] : memref<1x16xf32, #tpu.memory_space<vmem>>, vector<1x16xf32>
    %c0_15 = arith.constant 0 : index
    %c0_16 = arith.constant 0 : index
    %19 = vector.load %arg7[%c0_15, %c0_16] : memref<1x16xf32, #tpu.memory_space<vmem>>, vector<1x16xf32>
    %cst_17 = arith.constant dense<0.000000e+00> : vector<200xf32>
    %20 = vector.multi_reduction <add>, %17, %cst_17 [1] : vector<200x16xf32> to vector<200xf32>
    %21 = vector.shape_cast %20 : vector<200xf32> to vector<200x1xf32>
    %cst_18 = arith.constant 1.600000e+01 : f32
    %22 = vector.broadcast %cst_18 : f32 to vector<200x1xf32>
    %23 = arith.divf %21, %22 : vector<200x1xf32>
    %24 = vector.broadcast %23 : vector<200x1xf32> to vector<200x16xf32>
    %25 = arith.subf %17, %24 : vector<200x16xf32>
    %26 = arith.mulf %25, %25 : vector<200x16xf32>
    %cst_19 = arith.constant dense<0.000000e+00> : vector<200xf32>
    %27 = vector.multi_reduction <add>, %26, %cst_19 [1] : vector<200x16xf32> to vector<200xf32>
    %28 = vector.shape_cast %27 : vector<200xf32> to vector<200x1xf32>
    %cst_20 = arith.constant 1.600000e+01 : f32
    %29 = vector.broadcast %cst_20 : f32 to vector<200x1xf32>
    %30 = arith.divf %28, %29 : vector<200x1xf32>
    %cst_21 = arith.constant 9.99999974E-6 : f32
    %31 = vector.broadcast %cst_21 : f32 to vector<200x1xf32>
    %32 = arith.addf %30, %31 : vector<200x1xf32>
    %33 = math.rsqrt %32 : vector<200x1xf32>
    %34 = vector.broadcast %33 : vector<200x1xf32> to vector<200x16xf32>
    %35 = arith.mulf %25, %34 : vector<200x16xf32>
    %36 = vector.broadcast %18 : vector<1x16xf32> to vector<200x16xf32>
    %37 = arith.mulf %35, %36 : vector<200x16xf32>
    %38 = vector.broadcast %19 : vector<1x16xf32> to vector<200x16xf32>
    %39 = arith.addf %37, %38 : vector<200x16xf32>
    %cst_22 = arith.constant 0.000000e+00 : f32
    %40 = vector.broadcast %cst_22 : f32 to vector<200x16xf32>
    %41 = arith.maximumf %39, %40 : vector<200x16xf32>
    %c0_23 = arith.constant 0 : index
    %c0_24 = arith.constant 0 : index
    %42 = vector.load %arg8[%c0_23, %c0_24] : memref<16x4xf32, #tpu.memory_space<vmem>>, vector<16x4xf32>
    %cst_25 = arith.constant dense<0.000000e+00> : vector<200x4xf32>
    %43 = tpu.matmul %41, %42, %cst_25 {dimension_numbers = #tpu.dot_dimension_numbers<[1], [0], [0], [1], [0, 0, 1, 1], [], []>} : vector<200x16xf32>, vector<16x4xf32>, vector<200x4xf32> -> vector<200x4xf32>
    %c0_26 = arith.constant 0 : index
    %c0_27 = arith.constant 0 : index
    %44 = vector.load %arg9[%c0_26, %c0_27] : memref<1x4xf32, #tpu.memory_space<vmem>>, vector<1x4xf32>
    %45 = vector.broadcast %44 : vector<1x4xf32> to vector<200x4xf32>
    %46 = arith.addf %43, %45 : vector<200x4xf32>
    %c0_28 = arith.constant 0 : index
    %c0_29 = arith.constant 0 : index
    %47 = vector.load %arg10[%c0_28, %c0_29] : memref<1x4xf32, #tpu.memory_space<vmem>>, vector<1x4xf32>
    %c0_30 = arith.constant 0 : index
    %c0_31 = arith.constant 0 : index
    %48 = vector.load %arg11[%c0_30, %c0_31] : memref<1x4xf32, #tpu.memory_space<vmem>>, vector<1x4xf32>
    %cst_32 = arith.constant dense<0.000000e+00> : vector<200xf32>
    %49 = vector.multi_reduction <add>, %46, %cst_32 [1] : vector<200x4xf32> to vector<200xf32>
    %50 = vector.shape_cast %49 : vector<200xf32> to vector<200x1xf32>
    %cst_33 = arith.constant 4.000000e+00 : f32
    %51 = vector.broadcast %cst_33 : f32 to vector<200x1xf32>
    %52 = arith.divf %50, %51 : vector<200x1xf32>
    %53 = vector.broadcast %52 : vector<200x1xf32> to vector<200x4xf32>
    %54 = arith.subf %46, %53 : vector<200x4xf32>
    %55 = arith.mulf %54, %54 : vector<200x4xf32>
    %cst_34 = arith.constant dense<0.000000e+00> : vector<200xf32>
    %56 = vector.multi_reduction <add>, %55, %cst_34 [1] : vector<200x4xf32> to vector<200xf32>
    %57 = vector.shape_cast %56 : vector<200xf32> to vector<200x1xf32>
    %cst_35 = arith.constant 4.000000e+00 : f32
    %58 = vector.broadcast %cst_35 : f32 to vector<200x1xf32>
    %59 = arith.divf %57, %58 : vector<200x1xf32>
    %cst_36 = arith.constant 9.99999974E-6 : f32
    %60 = vector.broadcast %cst_36 : f32 to vector<200x1xf32>
    %61 = arith.addf %59, %60 : vector<200x1xf32>
    %62 = math.rsqrt %61 : vector<200x1xf32>
    %63 = vector.broadcast %62 : vector<200x1xf32> to vector<200x4xf32>
    %64 = arith.mulf %54, %63 : vector<200x4xf32>
    %65 = vector.broadcast %47 : vector<1x4xf32> to vector<200x4xf32>
    %66 = arith.mulf %64, %65 : vector<200x4xf32>
    %67 = vector.broadcast %48 : vector<1x4xf32> to vector<200x4xf32>
    %68 = arith.addf %66, %67 : vector<200x4xf32>
    %cst_37 = arith.constant 0.000000e+00 : f32
    %69 = vector.broadcast %cst_37 : f32 to vector<200x4xf32>
    %70 = arith.maximumf %68, %69 : vector<200x4xf32>
    %c0_38 = arith.constant 0 : index
    %c0_39 = arith.constant 0 : index
    %71 = vector.load %arg12[%c0_38, %c0_39] : memref<4x128xf32, #tpu.memory_space<vmem>>, vector<4x128xf32>
    %cst_40 = arith.constant dense<0.000000e+00> : vector<200x128xf32>
    %72 = tpu.matmul %70, %71, %cst_40 {dimension_numbers = #tpu.dot_dimension_numbers<[1], [0], [0], [1], [0, 0, 1, 1], [], []>} : vector<200x4xf32>, vector<4x128xf32>, vector<200x128xf32> -> vector<200x128xf32>
    %c0_41 = arith.constant 0 : index
    %c0_42 = arith.constant 0 : index
    %73 = vector.load %arg13[%c0_41, %c0_42] : memref<1x128xf32, #tpu.memory_space<vmem>>, vector<1x128xf32>
    %74 = vector.broadcast %73 : vector<1x128xf32> to vector<200x128xf32>
    %75 = arith.addf %72, %74 : vector<200x128xf32>
    %c0_43 = arith.constant 0 : index
    %c0_44 = arith.constant 0 : index
    %76 = vector.load %arg14[%c0_43, %c0_44] : memref<200x128xf32, #tpu.memory_space<vmem>>, vector<200x128xf32>
    tpu.vector_store %arg14[%c0_43, %c0_44], %75 {strides = array<i32>} : memref<200x128xf32, #tpu.memory_space<vmem>>, vector<200x128xf32>,
    return
  }
  func.func @transform_0(%arg0: i32) -> (i32, i32) {
    %c0_i32 = arith.constant 0 : i32
    %c0_i32_0 = arith.constant 0 : i32
    return %arg0, %c0_i32 : i32, i32
  }
  func.func @transform_1(%arg0: i32) -> (i32, i32) {
    %c0_i32 = arith.constant 0 : i32
    %c0_i32_0 = arith.constant 0 : i32
    %c0_i32_1 = arith.constant 0 : i32
    return %c0_i32, %c0_i32_0 : i32, i32
  }
  func.func @transform_2(%arg0: i32) -> (i32, i32) {
    %c0_i32 = arith.constant 0 : i32
    %c0_i32_0 = arith.constant 0 : i32
    %c0_i32_1 = arith.constant 0 : i32
    return %c0_i32, %c0_i32_0 : i32, i32
  }
  func.func @transform_3(%arg0: i32) -> (i32, i32) {
    %c0_i32 = arith.constant 0 : i32
    %c0_i32_0 = arith.constant 0 : i32
    %c0_i32_1 = arith.constant 0 : i32
    return %c0_i32, %c0_i32_0 : i32, i32
  }
  func.func @transform_4(%arg0: i32) -> (i32, i32) {
    %c0_i32 = arith.constant 0 : i32
    %c0_i32_0 = arith.constant 0 : i32
    %c0_i32_1 = arith.constant 0 : i32
    return %c0_i32, %c0_i32_0 : i32, i32
  }
  func.func @transform_5(%arg0: i32) -> (i32, i32) {
    %c0_i32 = arith.constant 0 : i32
    %c0_i32_0 = arith.constant 0 : i32
    %c0_i32_1 = arith.constant 0 : i32
    return %c0_i32, %c0_i32_0 : i32, i32
  }
  func.func @transform_6(%arg0: i32) -> (i32, i32) {
    %c0_i32 = arith.constant 0 : i32
    %c0_i32_0 = arith.constant 0 : i32
    %c0_i32_1 = arith.constant 0 : i32
    return %c0_i32, %c0_i32_0 : i32, i32
  }
  func.func @transform_7(%arg0: i32) -> (i32, i32) {
    %c0_i32 = arith.constant 0 : i32
    %c0_i32_0 = arith.constant 0 : i32
    %c0_i32_1 = arith.constant 0 : i32
    return %c0_i32, %c0_i32_0 : i32, i32
  }
  func.func @transform_8(%arg0: i32) -> (i32, i32) {
    %c0_i32 = arith.constant 0 : i32
    %c0_i32_0 = arith.constant 0 : i32
    %c0_i32_1 = arith.constant 0 : i32
    return %c0_i32, %c0_i32_0 : i32, i32
  }
  func.func @transform_9(%arg0: i32) -> (i32, i32) {
    %c0_i32 = arith.constant 0 : i32
    %c0_i32_0 = arith.constant 0 : i32
    %c0_i32_1 = arith.constant 0 : i32
    return %c0_i32, %c0_i32_0 : i32, i32
  }
  func.func @transform_10(%arg0: i32) -> (i32, i32) {
    %c0_i32 = arith.constant 0 : i32
    %c0_i32_0 = arith.constant 0 : i32
    %c0_i32_1 = arith.constant 0 : i32
    return %c0_i32, %c0_i32_0 : i32, i32
  }
  func.func @transform_11(%arg0: i32) -> (i32, i32) {
    %c0_i32 = arith.constant 0 : i32
    %c0_i32_0 = arith.constant 0 : i32
    %c0_i32_1 = arith.constant 0 : i32
    return %c0_i32, %c0_i32_0 : i32, i32
  }
  func.func @transform_12(%arg0: i32) -> (i32, i32) {
    %c0_i32 = arith.constant 0 : i32
    %c0_i32_0 = arith.constant 0 : i32
    %c0_i32_1 = arith.constant 0 : i32
    return %c0_i32, %c0_i32_0 : i32, i32
  }
  func.func @transform_13(%arg0: i32) -> (i32, i32) {
    %c0_i32 = arith.constant 0 : i32
    %c0_i32_0 = arith.constant 0 : i32
    return %arg0, %c0_i32 : i32, i32
  }
}

</mosaic_0001>

<llo_original>
// kernel: seffnet_forward.1
$region0: #{seffnet_forward.1}
  #allocation0 [shape = 'u32[]', space=smem, size = 0x4, offset = 0x4, fixed_abs, tag = 'smem constant byte address 0x4 - core index']
  #allocation1 [shape = 'u32[144,128]{1,0:T(1,128)}', space=vmem, size = 0x12000, scoped, tag = 'internal scratch']
  %s0 = inlined_call_operand.vmem [shape: f32[200,64], index: 0, kind: input, shape index: {}]
  %s1 = inlined_call_operand.vmem [shape: f32[64,32], index: 1, kind: input, shape index: {}]
  %s2 = inlined_call_operand.vmem [shape: f32[32,64], index: 2, kind: input, shape index: {}]
  %s3 = inlined_call_operand.vmem [shape: f32[64,16], index: 3, kind: input, shape index: {}]
  %s4 = inlined_call_operand.vmem [shape: f32[1,16], index: 4, kind: input, shape index: {}]
  %s5 = inlined_call_operand.vmem [shape: f32[1,16], index: 5, kind: input, shape index: {}]
  %s6 = inlined_call_operand.vmem [shape: f32[1,16], index: 6, kind: input, shape index: {}]
  %s7 = inlined_call_operand.vmem [shape: f32[16,4], index: 7, kind: input, shape index: {}]
  %s8 = inlined_call_operand.vmem [shape: f32[1,4], index: 8, kind: input, shape index: {}]
  %s9 = inlined_call_operand.vmem [shape: f32[1,4], index: 9, kind: input, shape index: {}]
  %s10 = inlined_call_operand.vmem [shape: f32[1,4], index: 10, kind: input, shape index: {}]
  %s11 = inlined_call_operand.vmem [shape: f32[4,128], index: 11, kind: input, shape index: {}]
  %s12 = inlined_call_operand.vmem [shape: f32[1,128], index: 12, kind: input, shape index: {}]
  %s13 = inlined_call_operand.vmem [shape: f32[200,128], index: 13, kind: output, shape index: {}]
  %s14 = sld [smem:[#allocation0]]
  $region62: #{seffnet_forward.1} parent=0
    _
  %s16 = ssub.s32 1, %s14
  %s17 = scalar_select 0, %s16, %s14
  // Predicated region
  $region2: #{seffnet_forward.1} parent=0 // pred_check
    _
  $region3: #{seffnet_forward.1} parent=0 // pred_check_branch
    %19 = sbr.rel (0) target = $region5
  $region4: #{seffnet_forward.1} parent=0 // pred_region
    _
  $region5: #{seffnet_forward.1} parent=0 // pred_fallthru
    _
  // Predicated region
  $region6: #{seffnet_forward.1} parent=0 // pred_check
    _
  $region7: #{seffnet_forward.1} parent=0 // pred_check_branch
    %21 = sbr.rel (0) target = $region9
  $region8: #{seffnet_forward.1} parent=0 // pred_region
    _
  $region9: #{seffnet_forward.1} parent=0 // pred_fallthru
    _
  // Predicated region
  $region10: #{seffnet_forward.1} parent=0 // pred_check
    _
  $region11: #{seffnet_forward.1} parent=0 // pred_check_branch
    %23 = sbr.rel (0) target = $region13
  $region12: #{seffnet_forward.1} parent=0 // pred_region
    _
  $region13: #{seffnet_forward.1} parent=0 // pred_fallthru
    _
  // Predicated region
  $region14: #{seffnet_forward.1} parent=0 // pred_check
    _
  $region15: #{seffnet_forward.1} parent=0 // pred_check_branch
    %25 = sbr.rel (0) target = $region17
  $region16: #{seffnet_forward.1} parent=0 // pred_region
    _
  $region17: #{seffnet_forward.1} parent=0 // pred_fallthru
    _
  // Predicated region
  $region18: #{seffnet_forward.1} parent=0 // pred_check
    _
  $region19: #{seffnet_forward.1} parent=0 // pred_check_branch
    %27 = sbr.rel (0) target = $region21
  $region20: #{seffnet_forward.1} parent=0 // pred_region
    _
  $region21: #{seffnet_forward.1} parent=0 // pred_fallthru
    _
  // Predicated region
  $region22: #{seffnet_forward.1} parent=0 // pred_check
    _
  $region23: #{seffnet_forward.1} parent=0 // pred_check_branch
    %29 = sbr.rel (0) target = $region25
  $region24: #{seffnet_forward.1} parent=0 // pred_region
    _
  $region25: #{seffnet_forward.1} parent=0 // pred_fallthru
    _
  // Predicated region
  $region26: #{seffnet_forward.1} parent=0 // pred_check
    _
  $region27: #{seffnet_forward.1} parent=0 // pred_check_branch
    %31 = sbr.rel (0) target = $region29
  $region28: #{seffnet_forward.1} parent=0 // pred_region
    _
  $region29: #{seffnet_forward.1} parent=0 // pred_fallthru
    _
  // Predicated region
  $region30: #{seffnet_forward.1} parent=0 // pred_check
    _
  $region31: #{seffnet_forward.1} parent=0 // pred_check_branch
    %33 = sbr.rel (0) target = $region33
  $region32: #{seffnet_forward.1} parent=0 // pred_region
    _
  $region33: #{seffnet_forward.1} parent=0 // pred_fallthru
    _
  // Predicated region
  $region34: #{seffnet_forward.1} parent=0 // pred_check
    _
  $region35: #{seffnet_forward.1} parent=0 // pred_check_branch
    %35 = sbr.rel (0) target = $region37
  $region36: #{seffnet_forward.1} parent=0 // pred_region
    _
  $region37: #{seffnet_forward.1} parent=0 // pred_fallthru
    _
  // Predicated region
  $region38: #{seffnet_forward.1} parent=0 // pred_check
    _
  $region39: #{seffnet_forward.1} parent=0 // pred_check_branch
    %37 = sbr.rel (0) target = $region41
  $region40: #{seffnet_forward.1} parent=0 // pred_region
    _
  $region41: #{seffnet_forward.1} parent=0 // pred_fallthru
    _
  // Predicated region
  $region42: #{seffnet_forward.1} parent=0 // pred_check
    _
  $region43: #{seffnet_forward.1} parent=0 // pred_check_branch
    %39 = sbr.rel (0) target = $region45
  $region44: #{seffnet_forward.1} parent=0 // pred_region
    _
  $region45: #{seffnet_forward.1} parent=0 // pred_fallthru
    _
  // Predicated region
  $region46: #{seffnet_forward.1} parent=0 // pred_check
    _
  $region47: #{seffnet_forward.1} parent=0 // pred_check_branch
    %41 = sbr.rel (0) target = $region49
  $region48: #{seffnet_forward.1} parent=0 // pred_region
    _
  $region49: #{seffnet_forward.1} parent=0 // pred_fallthru
    _
  // Predicated region
  $region50: #{seffnet_forward.1} parent=0 // pred_check
    _
  $region51: #{seffnet_forward.1} parent=0 // pred_check_branch
    %43 = sbr.rel (0) target = $region53
  $region52: #{seffnet_forward.1} parent=0 // pred_region
    _
  $region53: #{seffnet_forward.1} parent=0 // pred_fallthru
    _
  %v44 = vld [vmem:[%s0] sm:$0xff]
  %v45 = vld [vmem:[%s0 + $0x8] sm:$0xff]
  %v46 = vld [vmem:[%s0 + $0x10] sm:$0xff]
  %v47 = vld [vmem:[%s0 + $0x18] sm:$0xff]
  %v48 = vld [vmem:[%s0 + $0x20] sm:$0xff]
  %v49 = vld [vmem:[%s0 + $0x28] sm:$0xff]
  %v50 = vld [vmem:[%s0 + $0x30] sm:$0xff]
  %v51 = vld [vmem:[%s0 + $0x38] sm:$0xff]
  %v52 = vld [vmem:[%s0 + $0x40] sm:$0xff]
  %v53 = vld [vmem:[%s0 + $0x48] sm:$0xff]
  %v54 = vld [vmem:[%s0 + $0x50] sm:$0xff]
  %v55 = vld [vmem:[%s0 + $0x58] sm:$0xff]
  %v56 = vld [vmem:[%s0 + $0x60] sm:$0xff]
  %v57 = vld [vmem:[%s0 + $0x68] sm:$0xff]
  %v58 = vld [vmem:[%s0 + $0x70] sm:$0xff]
  %v59 = vld [vmem:[%s0 + $0x78] sm:$0xff]
  %v60 = vld [vmem:[%s0 + $0x80] sm:$0xff]
  %v61 = vld [vmem:[%s0 + $0x88] sm:$0xff]
  %v62 = vld [vmem:[%s0 + $0x90] sm:$0xff]
  %v63 = vld [vmem:[%s0 + $0x98] sm:$0xff]
  %v64 = vld [vmem:[%s0 + $0xa0] sm:$0xff]
  %v65 = vld [vmem:[%s0 + $0xa8] sm:$0xff]
  %v66 = vld [vmem:[%s0 + $0xb0] sm:$0xff]
  %v67 = vld [vmem:[%s0 + $0xb8] sm:$0xff]
  %v68 = vld [vmem:[%s0 + $0xc0] sm:$0xff]
  %v69 = vld [vmem:[%s1] sm:$0xff]
  %v70 = vld [vmem:[%s1 + $0x8] sm:$0xff]
  %v71 = vld [vmem:[%s1 + $0x10] sm:$0xff]
  %v72 = vld [vmem:[%s1 + $0x18] sm:$0xff]
  %v73 = vld [vmem:[%s1 + $0x20] sm:$0xff]
  %v74 = vld [vmem:[%s1 + $0x28] sm:$0xff]
  %v75 = vld [vmem:[%s1 + $0x30] sm:$0xff]
  %v76 = vld [vmem:[%s1 + $0x38] sm:$0xff]
  %vm77 = vcmask 523264
  %v79 = vsel %vm77, %v44, 0
  %v82 = vsel %vm77, %v45, 0
  %v85 = vsel %vm77, %v46, 0
  %v88 = vsel %vm77, %v47, 0
  %v91 = vsel %vm77, %v48, 0
  %v94 = vsel %vm77, %v49, 0
  %v97 = vsel %vm77, %v50, 0
  %v100 = vsel %vm77, %v51, 0
  %v103 = vsel %vm77, %v52, 0
  %v106 = vsel %vm77, %v53, 0
  %v109 = vsel %vm77, %v54, 0
  %v112 = vsel %vm77, %v55, 0
  %v115 = vsel %vm77, %v56, 0
  %v118 = vsel %vm77, %v57, 0
  %v121 = vsel %vm77, %v58, 0
  %v124 = vsel %vm77, %v59, 0
  %v127 = vsel %vm77, %v60, 0
  %v130 = vsel %vm77, %v61, 0
  %v133 = vsel %vm77, %v62, 0
  %v136 = vsel %vm77, %v63, 0
  %v139 = vsel %vm77, %v64, 0
  %v142 = vsel %vm77, %v65, 0
  %v145 = vsel %vm77, %v66, 0
  %v148 = vsel %vm77, %v67, 0
  %v151 = vsel %vm77, %v68, 0
  %153 = vmatprep.subr.mxu0 0.0
  %154 = vmatpush1.msra.mxu0 %v69
  %155 = vmatprep.subr.mxu0 0.0
  %156 = vmatpush1.msra.mxu0 %v70
  %157 = vmatprep.subr.mxu0 0.0
  %158 = vmatpush1.msra.mxu0 %v71
  %159 = vmatprep.subr.mxu0 0.0
  %160 = vmatpush1.msra.mxu0 %v72
  %161 = vmatprep.subr.mxu0 0.0
  %162 = vmatpush1.msra.mxu0 %v73
  %163 = vmatprep.subr.mxu0 0.0
  %164 = vmatpush1.msra.mxu0 %v74
  %165 = vmatprep.subr.mxu0 0.0
  %166 = vmatpush1.msra.mxu0 %v75
  %167 = vmatprep.subr.mxu0 0.0
  %168 = vmatpush1.msra.mxu0 %v76
  %169 = vmatprep.subr.mxu0 0.0
  %170 = vmatpush1.msra.mxu0 0.0
  %171 = vmatprep.subr.mxu0 0.0
  %172 = vmatpush1.msra.mxu0 0.0
  %173 = vmatprep.subr.mxu0 0.0
  %174 = vmatpush1.msra.mxu0 0.0
  %175 = vmatprep.subr.mxu0 0.0
  %176 = vmatpush1.msra.mxu0 0.0
  %177 = vmatprep.subr.mxu0 0.0
  %178 = vmatpush1.msra.mxu0 0.0
  %179 = vmatprep.subr.mxu0 0.0
  %180 = vmatpush1.msra.mxu0 0.0
  %181 = vmatprep.subr.mxu0 0.0
  %182 = vmatpush1.msra.mxu0 0.0
  %183 = vmatprep.subr.mxu0 0.0
  %184 = vmatpush1.msra.mxu0 0.0
  %185 = vmatprep.subr.mxu0 0.0
  %186 = vmatpush1.msra.mxu0 0.0
  %187 = vmatprep.subr.mxu0 0.0
  %188 = vmatpush1.msra.mxu0 0.0
  %189 = vmatprep.subr.mxu0 0.0
  %190 = vmatpush1.msra.mxu0 0.0
  %191 = vmatprep.subr.mxu0 0.0
  %192 = vmatpush1.msra.mxu0 0.0
  %193 = vmatprep.subr.mxu0 0.0
  %194 = vmatpush1.msra.mxu0 0.0
  %195 = vmatprep.subr.mxu0 0.0
  %196 = vmatpush1.msra.mxu0 0.0
  %197 = vmatprep.subr.mxu0 0.0
  %198 = vmatpush1.msra.mxu0 0.0
  %199 = vmatprep.subr.mxu0 0.0
  %200 = vmatpush1.msra.mxu0 0.0
  %201 = vmatprep.subr.mxu0 0.0
  %202 = vmatpush1.msra.mxu0 0.0
  %203 = vmatprep.subr.mxu0 0.0
  %204 = vmatpush1.msra.mxu0 0.0
  %205 = vmatprep.subr.mxu0 0.0
  %206 = vmatpush1.msra.mxu0 0.0
  %207 = vmatprep.subr.mxu0 0.0
  %208 = vmatpush1.msra.mxu0 0.0
  %209 = vmatprep.subr.mxu0 0.0
  %210 = vmatpush1.msra.mxu0 0.0
  %211 = vmatprep.subr.mxu0 0.0
  %212 = vmatpush1.msra.mxu0 0.0
  %213 = vmatprep.subr.mxu0 0.0
  %214 = vmatpush1.msra.mxu0 0.0
  %215 = vmatprep.subr.mxu0 0.0
  %216 = vmatpush1.msra.mxu0 0.0
  %217 = vmatprep.mubr.f32.mxu0 0.0
  %218 = vmatmul.mubr.f32.gmra.mrb[0].mxu0 %v79
  %v219 = vpop.f32.mrb[0].mxu0
  %v220 = vadd.f32 0.0, %v219
  %v221 = vpop.f32.mrb[0].mxu0
  %222 = vmatprep.mubr.f32.mxu0 0.0
  %223 = vmatmul.mubr.f32.gmra.mrb[0].mxu0 %v82
  %v224 = vpop.f32.mrb[0].mxu0
  %v225 = vadd.f32 0.0, %v224
  %v226 = vpop.f32.mrb[0].mxu0
  %227 = vmatprep.mubr.f32.mxu0 0.0
  %228 = vmatmul.mubr.f32.gmra.mrb[0].mxu0 %v85
  %v229 = vpop.f32.mrb[0].mxu0
  %v230 = vadd.f32 0.0, %v229
  %v231 = vpop.f32.mrb[0].mxu0
  %232 = vmatprep.mubr.f32.mxu0 0.0
  %233 = vmatmul.mubr.f32.gmra.mrb[0].mxu0 %v88
  %v234 = vpop.f32.mrb[0].mxu0
  %v235 = vadd.f32 0.0, %v234
  %v236 = vpop.f32.mrb[0].mxu0
  %237 = vmatprep.mubr.f32.mxu0 0.0
  %238 = vmatmul.mubr.f32.gmra.mrb[0].mxu0 %v91
  %v239 = vpop.f32.mrb[0].mxu0
  %v240 = vadd.f32 0.0, %v239
  %v241 = vpop.f32.mrb[0].mxu0
  %242 = vmatprep.mubr.f32.mxu0 0.0
  %243 = vmatmul.mubr.f32.gmra.mrb[0].mxu0 %v94
  %v244 = vpop.f32.mrb[0].mxu0
  %v245 = vadd.f32 0.0, %v244
  %v246 = vpop.f32.mrb[0].mxu0
  %247 = vmatprep.mubr.f32.mxu0 0.0
  %248 = vmatmul.mubr.f32.gmra.mrb[0].mxu0 %v97
  %v249 = vpop.f32.mrb[0].mxu0
  %v250 = vadd.f32 0.0, %v249
  %v251 = vpop.f32.mrb[0].mxu0
  %252 = vmatprep.mubr.f32.mxu0 0.0
  %253 = vmatmul.mubr.f32.gmra.mrb[0].mxu0 %v100
  %v254 = vpop.f32.mrb[0].mxu0
  %v255 = vadd.f32 0.0, %v254
  %v256 = vpop.f32.mrb[0].mxu0
  %257 = vmatprep.mubr.f32.mxu0 0.0
  %258 = vmatmul.mubr.f32.gmra.mrb[0].mxu0 %v103
  %v259 = vpop.f32.mrb[0].mxu0
  %v260 = vadd.f32 0.0, %v259
  %v261 = vpop.f32.mrb[0].mxu0
  %262 = vmatprep.mubr.f32.mxu0 0.0
  %263 = vmatmul.mubr.f32.gmra.mrb[0].mxu0 %v106
  %v264 = vpop.f32.mrb[0].mxu0
  %v265 = vadd.f32 0.0, %v264
  %v266 = vpop.f32.mrb[0].mxu0
  %267 = vmatprep.mubr.f32.mxu0 0.0
  %268 = vmatmul.mubr.f32.gmra.mrb[0].mxu0 %v109
  %v269 = vpop.f32.mrb[0].mxu0
  %v270 = vadd.f32 0.0, %v269
  %v271 = vpop.f32.mrb[0].mxu0
  %272 = vmatprep.mubr.f32.mxu0 0.0
  %273 = vmatmul.mubr.f32.gmra.mrb[0].mxu0 %v112
  %v274 = vpop.f32.mrb[0].mxu0
  %v275 = vadd.f32 0.0, %v274
  %v276 = vpop.f32.mrb[0].mxu0
  %277 = vmatprep.mubr.f32.mxu0 0.0
  %278 = vmatmul.mubr.f32.gmra.mrb[0].mxu0 %v115
  %v279 = vpop.f32.mrb[0].mxu0
  %v280 = vadd.f32 0.0, %v279
  %v281 = vpop.f32.mrb[0].mxu0
  %282 = vmatprep.mubr.f32.mxu0 0.0
  %283 = vmatmul.mubr.f32.gmra.mrb[0].mxu0 %v118
  %v284 = vpop.f32.mrb[0].mxu0
  %v285 = vadd.f32 0.0, %v284
  %v286 = vpop.f32.mrb[0].mxu0
  %287 = vmatprep.mubr.f32.mxu0 0.0
  %288 = vmatmul.mubr.f32.gmra.mrb[0].mxu0 %v121
  %v289 = vpop.f32.mrb[0].mxu0
  %v290 = vadd.f32 0.0, %v289
  %v291 = vpop.f32.mrb[0].mxu0
  %292 = vmatprep.mubr.f32.mxu0 0.0
  %293 = vmatmul.mubr.f32.gmra.mrb[0].mxu0 %v124
  %v294 = vpop.f32.mrb[0].mxu0
  %v295 = vadd.f32 0.0, %v294
  %v296 = vpop.f32.mrb[0].mxu0
  %297 = vmatprep.mubr.f32.mxu0 0.0
  %298 = vmatmul.mubr.f32.gmra.mrb[0].mxu0 %v127
  %v299 = vpop.f32.mrb[0].mxu0
  %v300 = vadd.f32 0.0, %v299
  %v301 = vpop.f32.mrb[0].mxu0
  %302 = vmatprep.mubr.f32.mxu0 0.0
  %303 = vmatmul.mubr.f32.gmra.mrb[0].mxu0 %v130
  %v304 = vpop.f32.mrb[0].mxu0
  %v305 = vadd.f32 0.0, %v304
  %v306 = vpop.f32.mrb[0].mxu0
  %307 = vmatprep.mubr.f32.mxu0 0.0
  %308 = vmatmul.mubr.f32.gmra.mrb[0].mxu0 %v133
  %v309 = vpop.f32.mrb[0].mxu0
  %v310 = vadd.f32 0.0, %v309
  %v311 = vpop.f32.mrb[0].mxu0
  %312 = vmatprep.mubr.f32.mxu0 0.0
  %313 = vmatmul.mubr.f32.gmra.mrb[0].mxu0 %v136
  %v314 = vpop.f32.mrb[0].mxu0
  %v315 = vadd.f32 0.0, %v314
  %v316 = vpop.f32.mrb[0].mxu0
  %317 = vmatprep.mubr.f32.mxu0 0.0
  %318 = vmatmul.mubr.f32.gmra.mrb[0].mxu0 %v139
  %v319 = vpop.f32.mrb[0].mxu0
  %v320 = vadd.f32 0.0, %v319
  %v321 = vpop.f32.mrb[0].mxu0
  %322 = vmatprep.mubr.f32.mxu0 0.0
  %323 = vmatmul.mubr.f32.gmra.mrb[0].mxu0 %v142
  %v324 = vpop.f32.mrb[0].mxu0
  %v325 = vadd.f32 0.0, %v324
  %v326 = vpop.f32.mrb[0].mxu0
  %327 = vmatprep.mubr.f32.mxu0 0.0
  %328 = vmatmul.mubr.f32.gmra.mrb[0].mxu0 %v145
  %v329 = vpop.f32.mrb[0].mxu0
  %v330 = vadd.f32 0.0, %v329
  %v331 = vpop.f32.mrb[0].mxu0
  %332 = vmatprep.mubr.f32.mxu0 0.0
  %333 = vmatmul.mubr.f32.gmra.mrb[0].mxu0 %v148
  %v334 = vpop.f32.mrb[0].mxu0
  %v335 = vadd.f32 0.0, %v334
  %v336 = vpop.f32.mrb[0].mxu0
  %337 = vmatprep.mubr.f32.mxu0 0.0
  %338 = vmatmul.mubr.f32.gmra.mrb[0].mxu0 %v151
  %v339 = vpop.f32.mrb[0].mxu0
  %v340 = vadd.f32 0.0, %v339
  %v341 = vpop.f32.mrb[0].mxu0
  %342 = vdwg.mxu0
  %v343 = vmax.f32 %v220, 0.0
  %v344 = vmax.f32 %v225, 0.0
  %v345 = vmax.f32 %v230, 0.0
  %v346 = vmax.f32 %v235, 0.0
  %v347 = vmax.f32 %v240, 0.0
  %v348 = vmax.f32 %v245, 0.0
  %v349 = vmax.f32 %v250, 0.0
  %v350 = vmax.f32 %v255, 0.0
  %v351 = vmax.f32 %v260, 0.0
  %v352 = vmax.f32 %v265, 0.0
  %v353 = vmax.f32 %v270, 0.0
  %v354 = vmax.f32 %v275, 0.0
  %v355 = vmax.f32 %v280, 0.0
  %v356 = vmax.f32 %v285, 0.0
  %v357 = vmax.f32 %v290, 0.0
  %v358 = vmax.f32 %v295, 0.0
  %v359 = vmax.f32 %v300, 0.0
  %v360 = vmax.f32 %v305, 0.0
  %v361 = vmax.f32 %v310, 0.0
  %v362 = vmax.f32 %v315, 0.0
  %v363 = vmax.f32 %v320, 0.0
  %v364 = vmax.f32 %v325, 0.0
  %v365 = vmax.f32 %v330, 0.0
  %v366 = vmax.f32 %v335, 0.0
  %v367 = vmax.f32 %v340, 0.0
  %v368 = vld [vmem:[%s2] sm:$0xff]
  %v369 = vld [vmem:[%s2 + $0x8] sm:$0xff]
  %v370 = vld [vmem:[%s2 + $0x10] sm:$0xff]
  %v371 = vld [vmem:[%s2 + $0x18] sm:$0xff]
  %vm372 = vcmask 261120
  %v374 = vsel %vm372, %v343, 0
  %v377 = vsel %vm372, %v344, 0
  %v380 = vsel %vm372, %v345, 0
  %v383 = vsel %vm372, %v346, 0
  %v386 = vsel %vm372, %v347, 0
  %v389 = vsel %vm372, %v348, 0
  %v392 = vsel %vm372, %v349, 0
  %v395 = vsel %vm372, %v350, 0
  %v398 = vsel %vm372, %v351, 0
  %v401 = vsel %vm372, %v352, 0
  %v404 = vsel %vm372, %v353, 0
  %v407 = vsel %vm372, %v354, 0
  %v410 = vsel %vm372, %v355, 0
  %v413 = vsel %vm372, %v356, 0
  %v416 = vsel %vm372, %v357, 0
  %v419 = vsel %vm372, %v358, 0
  %v422 = vsel %vm372, %v359, 0
  %v425 = vsel %vm372, %v360, 0
  %v428 = vsel %vm372, %v361, 0
  %v431 = vsel %vm372, %v362, 0
  %v434 = vsel %vm372, %v363, 0
  %v437 = vsel %vm372, %v364, 0
  %v440 = vsel %vm372, %v365, 0
  %v443 = vsel %vm372, %v366, 0
  %v446 = vsel %vm372, %v367, 0
  %448 = vmatprep.subr.mxu0 0.0
  %449 = vmatpush1.msra.mxu0 %v368
  %450 = vmatprep.subr.mxu0 0.0
  %451 = vmatpush1.msra.mxu0 %v369
  %452 = vmatprep.subr.mxu0 0.0
  %453 = vmatpush1.msra.mxu0 %v370
  %454 = vmatprep.subr.mxu0 0.0
  %455 = vmatpush1.msra.mxu0 %v371
  %456 = vmatprep.subr.mxu0 0.0
  %457 = vmatpush1.msra.mxu0 0.0
  %458 = vmatprep.subr.mxu0 0.0
  %459 = vmatpush1.msra.mxu0 0.0
  %460 = vmatprep.subr.mxu0 0.0
  %461 = vmatpush1.msra.mxu0 0.0
  %462 = vmatprep.subr.mxu0 0.0
  %463 = vmatpush1.msra.mxu0 0.0
  %464 = vmatprep.subr.mxu0 0.0
  %465 = vmatpush1.msra.mxu0 0.0
  %466 = vmatprep.subr.mxu0 0.0
  %467 = vmatpush1.msra.mxu0 0.0
  %468 = vmatprep.subr.mxu0 0.0
  %469 = vmatpush1.msra.mxu0 0.0
  %470 = vmatprep.subr.mxu0 0.0
  %471 = vmatpush1.msra.mxu0 0.0
  %472 = vmatprep.subr.mxu0 0.0
  %473 = vmatpush1.msra.mxu0 0.0
  %474 = vmatprep.subr.mxu0 0.0
  %475 = vmatpush1.msra.mxu0 0.0
  %476 = vmatprep.subr.mxu0 0.0
  %477 = vmatpush1.msra.mxu0 0.0
  %478 = vmatprep.subr.mxu0 0.0
  %479 = vmatpush1.msra.mxu0 0.0
  %480 = vmatprep.subr.mxu0 0.0
  %481 = vmatpush1.msra.mxu0 0.0
  %482 = vmatprep.subr.mxu0 0.0
  %483 = vmatpush1.msra.mxu0 0.0
  %484 = vmatprep.subr.mxu0 0.0
  %485 = vmatpush1.msra.mxu0 0.0
  %486 = vmatprep.subr.mxu0 0.0
  %487 = vmatpush1.msra.mxu0 0.0
  %488 = vmatprep.subr.mxu0 0.0
  %489 = vmatpush1.msra.mxu0 0.0
  %490 = vmatprep.subr.mxu0 0.0
  %491 = vmatpush1.msra.mxu0 0.0
  %492 = vmatprep.subr.mxu0 0.0
  %493 = vmatpush1.msra.mxu0 0.0
  %494 = vmatprep.subr.mxu0 0.0
  %495 = vmatpush1.msra.mxu0 0.0
  %496 = vmatprep.subr.mxu0 0.0
  %497 = vmatpush1.msra.mxu0 0.0
  %498 = vmatprep.subr.mxu0 0.0
  %499 = vmatpush1.msra.mxu0 0.0
  %500 = vmatprep.subr.mxu0 0.0
  %501 = vmatpush1.msra.mxu0 0.0
  %502 = vmatprep.subr.mxu0 0.0
  %503 = vmatpush1.msra.mxu0 0.0
  %504 = vmatprep.subr.mxu0 0.0
  %505 = vmatpush1.msra.mxu0 0.0
  %506 = vmatprep.subr.mxu0 0.0
  %507 = vmatpush1.msra.mxu0 0.0
  %508 = vmatprep.subr.mxu0 0.0
  %509 = vmatpush1.msra.mxu0 0.0
  %510 = vmatprep.subr.mxu0 0.0
  %511 = vmatpush1.msra.mxu0 0.0
  %512 = vmatprep.mubr.f32.mxu0 0.0
  %513 = vmatmul.mubr.f32.gmra.mrb[0].mxu0 %v374
  %v514 = vpop.f32.mrb[0].mxu0
  %v515 = vadd.f32 0.0, %v514
  %v516 = vpop.f32.mrb[0].mxu0
  %517 = vmatprep.mubr.f32.mxu0 0.0
  %518 = vmatmul.mubr.f32.gmra.mrb[0].mxu0 %v377
  %v519 = vpop.f32.mrb[0].mxu0
  %v520 = vadd.f32 0.0, %v519
  %v521 = vpop.f32.mrb[0].mxu0
  %522 = vmatprep.mubr.f32.mxu0 0.0
  %523 = vmatmul.mubr.f32.gmra.mrb[0].mxu0 %v380
  %v524 = vpop.f32.mrb[0].mxu0
  %v525 = vadd.f32 0.0, %v524
  %v526 = vpop.f32.mrb[0].mxu0
  %527 = vmatprep.mubr.f32.mxu0 0.0
  %528 = vmatmul.mubr.f32.gmra.mrb[0].mxu0 %v383
  %v529 = vpop.f32.mrb[0].mxu0
  %v530 = vadd.f32 0.0, %v529
  %v531 = vpop.f32.mrb[0].mxu0
  %532 = vmatprep.mubr.f32.mxu0 0.0
  %533 = vmatmul.mubr.f32.gmra.mrb[0].mxu0 %v386
  %v534 = vpop.f32.mrb[0].mxu0
  %v535 = vadd.f32 0.0, %v534
  %v536 = vpop.f32.mrb[0].mxu0
  %537 = vmatprep.mubr.f32.mxu0 0.0
  %538 = vmatmul.mubr.f32.gmra.mrb[0].mxu0 %v389
  %v539 = vpop.f32.mrb[0].mxu0
  %v540 = vadd.f32 0.0, %v539
  %v541 = vpop.f32.mrb[0].mxu0
  %542 = vmatprep.mubr.f32.mxu0 0.0
  %543 = vmatmul.mubr.f32.gmra.mrb[0].mxu0 %v392
  %v544 = vpop.f32.mrb[0].mxu0
  %v545 = vadd.f32 0.0, %v544
  %v546 = vpop.f32.mrb[0].mxu0
  %547 = vmatprep.mubr.f32.mxu0 0.0
  %548 = vmatmul.mubr.f32.gmra.mrb[0].mxu0 %v395
  %v549 = vpop.f32.mrb[0].mxu0
  %v550 = vadd.f32 0.0, %v549
  %v551 = vpop.f32.mrb[0].mxu0
  %552 = vmatprep.mubr.f32.mxu0 0.0
  %553 = vmatmul.mubr.f32.gmra.mrb[0].mxu0 %v398
  %v554 = vpop.f32.mrb[0].mxu0
  %v555 = vadd.f32 0.0, %v554
  %v556 = vpop.f32.mrb[0].mxu0
  %557 = vmatprep.mubr.f32.mxu0 0.0
  %558 = vmatmul.mubr.f32.gmra.mrb[0].mxu0 %v401
  %v559 = vpop.f32.mrb[0].mxu0
  %v560 = vadd.f32 0.0, %v559
  %v561 = vpop.f32.mrb[0].mxu0
  %562 = vmatprep.mubr.f32.mxu0 0.0
  %563 = vmatmul.mubr.f32.gmra.mrb[0].mxu0 %v404
  %v564 = vpop.f32.mrb[0].mxu0
  %v565 = vadd.f32 0.0, %v564
  %v566 = vpop.f32.mrb[0].mxu0
  %567 = vmatprep.mubr.f32.mxu0 0.0
  %568 = vmatmul.mubr.f32.gmra.mrb[0].mxu0 %v407
  %v569 = vpop.f32.mrb[0].mxu0
  %v570 = vadd.f32 0.0, %v569
  %v571 = vpop.f32.mrb[0].mxu0
  %572 = vmatprep.mubr.f32.mxu0 0.0
  %573 = vmatmul.mubr.f32.gmra.mrb[0].mxu0 %v410
  %v574 = vpop.f32.mrb[0].mxu0
  %v575 = vadd.f32 0.0, %v574
  %v576 = vpop.f32.mrb[0].mxu0
  %577 = vmatprep.mubr.f32.mxu0 0.0
  %578 = vmatmul.mubr.f32.gmra.mrb[0].mxu0 %v413
  %v579 = vpop.f32.mrb[0].mxu0
  %v580 = vadd.f32 0.0, %v579
  %v581 = vpop.f32.mrb[0].mxu0
  %582 = vmatprep.mubr.f32.mxu0 0.0
  %583 = vmatmul.mubr.f32.gmra.mrb[0].mxu0 %v416
  %v584 = vpop.f32.mrb[0].mxu0
  %v585 = vadd.f32 0.0, %v584
  %v586 = vpop.f32.mrb[0].mxu0
  %587 = vmatprep.mubr.f32.mxu0 0.0
  %588 = vmatmul.mubr.f32.gmra.mrb[0].mxu0 %v419
  %v589 = vpop.f32.mrb[0].mxu0
  %v590 = vadd.f32 0.0, %v589
  %v591 = vpop.f32.mrb[0].mxu0
  %592 = vmatprep.mubr.f32.mxu0 0.0
  %593 = vmatmul.mubr.f32.gmra.mrb[0].mxu0 %v422
  %v594 = vpop.f32.mrb[0].mxu0
  %v595 = vadd.f32 0.0, %v594
  %v596 = vpop.f32.mrb[0].mxu0
  %597 = vmatprep.mubr.f32.mxu0 0.0
  %598 = vmatmul.mubr.f32.gmra.mrb[0].mxu0 %v425
  %v599 = vpop.f32.mrb[0].mxu0
  %v600 = vadd.f32 0.0, %v599
  %v601 = vpop.f32.mrb[0].mxu0
  %602 = vmatprep.mubr.f32.mxu0 0.0
  %603 = vmatmul.mubr.f32.gmra.mrb[0].mxu0 %v428
  %v604 = vpop.f32.mrb[0].mxu0
  %v605 = vadd.f32 0.0, %v604
  %v606 = vpop.f32.mrb[0].mxu0
  %607 = vmatprep.mubr.f32.mxu0 0.0
  %608 = vmatmul.mubr.f32.gmra.mrb[0].mxu0 %v431
  %v609 = vpop.f32.mrb[0].mxu0
  %v610 = vadd.f32 0.0, %v609
  %v611 = vpop.f32.mrb[0].mxu0
  %612 = vmatprep.mubr.f32.mxu0 0.0
  %613 = vmatmul.mubr.f32.gmra.mrb[0].mxu0 %v434
  %v614 = vpop.f32.mrb[0].mxu0
  %v615 = vadd.f32 0.0, %v614
  %v616 = vpop.f32.mrb[0].mxu0
  %617 = vmatprep.mubr.f32.mxu0 0.0
  %618 = vmatmul.mubr.f32.gmra.mrb[0].mxu0 %v437
  %v619 = vpop.f32.mrb[0].mxu0
  %v620 = vadd.f32 0.0, %v619
  %v621 = vpop.f32.mrb[0].mxu0
  %622 = vmatprep.mubr.f32.mxu0 0.0
  %623 = vmatmul.mubr.f32.gmra.mrb[0].mxu0 %v440
  %v624 = vpop.f32.mrb[0].mxu0
  %v625 = vadd.f32 0.0, %v624
  %v626 = vpop.f32.mrb[0].mxu0
  %627 = vmatprep.mubr.f32.mxu0 0.0
  %628 = vmatmul.mubr.f32.gmra.mrb[0].mxu0 %v443
  %v629 = vpop.f32.mrb[0].mxu0
  %v630 = vadd.f32 0.0, %v629
  %v631 = vpop.f32.mrb[0].mxu0
  %632 = vmatprep.mubr.f32.mxu0 0.0
  %633 = vmatmul.mubr.f32.gmra.mrb[0].mxu0 %v446
  %v634 = vpop.f32.mrb[0].mxu0
  %v635 = vadd.f32 0.0, %v634
  %v636 = vpop.f32.mrb[0].mxu0
  %637 = vdwg.mxu0
  %v638 = vxor.u32 %v515, 2147483648
  %v639 = vxor.u32 %v520, 2147483648
  %v640 = vxor.u32 %v525, 2147483648
  %v641 = vxor.u32 %v530, 2147483648
  %v642 = vxor.u32 %v535, 2147483648
  %v643 = vxor.u32 %v540, 2147483648
  %v644 = vxor.u32 %v545, 2147483648
  %v645 = vxor.u32 %v550, 2147483648
  %v646 = vxor.u32 %v555, 2147483648
  %v647 = vxor.u32 %v560, 2147483648
  %v648 = vxor.u32 %v565, 2147483648
  %v649 = vxor.u32 %v570, 2147483648
  %v650 = vxor.u32 %v575, 2147483648
  %v651 = vxor.u32 %v580, 2147483648
  %v652 = vxor.u32 %v585, 2147483648
  %v653 = vxor.u32 %v590, 2147483648
  %v654 = vxor.u32 %v595, 2147483648
  %v655 = vxor.u32 %v600, 2147483648
  %v656 = vxor.u32 %v605, 2147483648
  %v657 = vxor.u32 %v610, 2147483648
  %v658 = vxor.u32 %v615, 2147483648
  %v659 = vxor.u32 %v620, 2147483648
  %v660 = vxor.u32 %v625, 2147483648
  %v661 = vxor.u32 %v630, 2147483648
  %v662 = vxor.u32 %v635, 2147483648
  %v663 = vmul.f32 %v638, 1.442695
  %v664 = vpow.pop %v663
  %v665 = vmul.f32 %v639, 1.442695
  %v666 = vpow.pop %v665
  %v667 = vmul.f32 %v640, 1.442695
  %v668 = vpow.pop %v667
  %v669 = vmul.f32 %v641, 1.442695
  %v670 = vpow.pop %v669
  %v671 = vmul.f32 %v642, 1.442695
  %v672 = vpow.pop %v671
  %v673 = vmul.f32 %v643, 1.442695
  %v674 = vpow.pop %v673
  %v675 = vmul.f32 %v644, 1.442695
  %v676 = vpow.pop %v675
  %v677 = vmul.f32 %v645, 1.442695
  %v678 = vpow.pop %v677
  %v679 = vmul.f32 %v646, 1.442695
  %v680 = vpow.pop %v679
  %v681 = vmul.f32 %v647, 1.442695
  %v682 = vpow.pop %v681
  %v683 = vmul.f32 %v648, 1.442695
  %v684 = vpow.pop %v683
  %v685 = vmul.f32 %v649, 1.442695
  %v686 = vpow.pop %v685
  %v687 = vmul.f32 %v650, 1.442695
  %v688 = vpow.pop %v687
  %v689 = vmul.f32 %v651, 1.442695
  %v690 = vpow.pop %v689
  %v691 = vmul.f32 %v652, 1.442695
  %v692 = vpow.pop %v691
  %v693 = vmul.f32 %v653, 1.442695
  %v694 = vpow.pop %v693
  %v695 = vmul.f32 %v654, 1.442695
  %v696 = vpow.pop %v695
  %v697 = vmul.f32 %v655, 1.442695
  %v698 = vpow.pop %v697
  %v699 = vmul.f32 %v656, 1.442695
  %v700 = vpow.pop %v699
  %v701 = vmul.f32 %v657, 1.442695
  %v702 = vpow.pop %v701
  %v703 = vmul.f32 %v658, 1.442695
  %v704 = vpow.pop %v703
  %v705 = vmul.f32 %v659, 1.442695
  %v706 = vpow.pop %v705
  %v707 = vmul.f32 %v660, 1.442695
  %v708 = vpow.pop %v707
  %v709 = vmul.f32 %v661, 1.442695
  %v710 = vpow.pop %v709
  %v711 = vmul.f32 %v662, 1.442695
  %v712 = vpow.pop %v711
  %v713 = vadd.f32 %v664, 1.0
  %v714 = vadd.f32 %v666, 1.0
  %v715 = vadd.f32 %v668, 1.0
  %v716 = vadd.f32 %v670, 1.0
  %v717 = vadd.f32 %v672, 1.0
  %v718 = vadd.f32 %v674, 1.0
  %v719 = vadd.f32 %v676, 1.0
  %v720 = vadd.f32 %v678, 1.0
  %v721 = vadd.f32 %v680, 1.0
  %v722 = vadd.f32 %v682, 1.0
  %v723 = vadd.f32 %v684, 1.0
  %v724 = vadd.f32 %v686, 1.0
  %v725 = vadd.f32 %v688, 1.0
  %v726 = vadd.f32 %v690, 1.0
  %v727 = vadd.f32 %v692, 1.0
  %v728 = vadd.f32 %v694, 1.0
  %v729 = vadd.f32 %v696, 1.0
  %v730 = vadd.f32 %v698, 1.0
  %v731 = vadd.f32 %v700, 1.0
  %v732 = vadd.f32 %v702, 1.0
  %v733 = vadd.f32 %v704, 1.0
  %v734 = vadd.f32 %v706, 1.0
  %v735 = vadd.f32 %v708, 1.0
  %v736 = vadd.f32 %v710, 1.0
  %v737 = vadd.f32 %v712, 1.0
  %v738 = vrcp.pop %v713
  %v739 = vmul.f32 1.0, %v738
  %v740 = vrcp.pop %v714
  %v741 = vmul.f32 1.0, %v740
  %v742 = vrcp.pop %v715
  %v743 = vmul.f32 1.0, %v742
  %v744 = vrcp.pop %v716
  %v745 = vmul.f32 1.0, %v744
  %v746 = vrcp.pop %v717
  %v747 = vmul.f32 1.0, %v746
  %v748 = vrcp.pop %v718
  %v749 = vmul.f32 1.0, %v748
  %v750 = vrcp.pop %v719
  %v751 = vmul.f32 1.0, %v750
  %v752 = vrcp.pop %v720
  %v753 = vmul.f32 1.0, %v752
  %v754 = vrcp.pop %v721
  %v755 = vmul.f32 1.0, %v754
  %v756 = vrcp.pop %v722
  %v757 = vmul.f32 1.0, %v756
  %v758 = vrcp.pop %v723
  %v759 = vmul.f32 1.0, %v758
  %v760 = vrcp.pop %v724
  %v761 = vmul.f32 1.0, %v760
  %v762 = vrcp.pop %v725
  %v763 = vmul.f32 1.0, %v762
  %v764 = vrcp.pop %v726
  %v765 = vmul.f32 1.0, %v764
  %v766 = vrcp.pop %v727
  %v767 = vmul.f32 1.0, %v766
  %v768 = vrcp.pop %v728
  %v769 = vmul.f32 1.0, %v768
  %v770 = vrcp.pop %v729
  %v771 = vmul.f32 1.0, %v770
  %v772 = vrcp.pop %v730
  %v773 = vmul.f32 1.0, %v772
  %v774 = vrcp.pop %v731
  %v775 = vmul.f32 1.0, %v774
  %v776 = vrcp.pop %v732
  %v777 = vmul.f32 1.0, %v776
  %v778 = vrcp.pop %v733
  %v779 = vmul.f32 1.0, %v778
  %v780 = vrcp.pop %v734
  %v781 = vmul.f32 1.0, %v780
  %v782 = vrcp.pop %v735
  %v783 = vmul.f32 1.0, %v782
  %v784 = vrcp.pop %v736
  %v785 = vmul.f32 1.0, %v784
  %v786 = vrcp.pop %v737
  %v787 = vmul.f32 1.0, %v786
  %v788 = vmul.f32 %v739, %v44
  %v789 = vmul.f32 %v741, %v45
  %v790 = vmul.f32 %v743, %v46
  %v791 = vmul.f32 %v745, %v47
  %v792 = vmul.f32 %v747, %v48
  %v793 = vmul.f32 %v749, %v49
  %v794 = vmul.f32 %v751, %v50
  %v795 = vmul.f32 %v753, %v51
  %v796 = vmul.f32 %v755, %v52
  %v797 = vmul.f32 %v757, %v53
  %v798 = vmul.f32 %v759, %v54
  %v799 = vmul.f32 %v761, %v55
  %v800 = vmul.f32 %v763, %v56
  %v801 = vmul.f32 %v765, %v57
  %v802 = vmul.f32 %v767, %v58
  %v803 = vmul.f32 %v769, %v59
  %v804 = vmul.f32 %v771, %v60
  %v805 = vmul.f32 %v773, %v61
  %v806 = vmul.f32 %v775, %v62
  %v807 = vmul.f32 %v777, %v63
  %v808 = vmul.f32 %v779, %v64
  %v809 = vmul.f32 %v781, %v65
  %v810 = vmul.f32 %v783, %v66
  %v811 = vmul.f32 %v785, %v67
  %v812 = vmul.f32 %v787, %v68
  %v813 = vld [vmem:[%s3] sm:$0xff]
  %v814 = vld [vmem:[%s3 + $0x8] sm:$0xff]
  %v815 = vld [vmem:[%s3 + $0x10] sm:$0xff]
  %v816 = vld [vmem:[%s3 + $0x18] sm:$0xff]
  %v817 = vld [vmem:[%s3 + $0x20] sm:$0xff]
  %v818 = vld [vmem:[%s3 + $0x28] sm:$0xff]
  %v819 = vld [vmem:[%s3 + $0x30] sm:$0xff]
  %v820 = vld [vmem:[%s3 + $0x38] sm:$0xff]
  %v821 = vld [vmem:[%s4] sm:$0x1]
  %v823 = vlaneseq
  %v824 = vshrl.u32 %v823, 7
  %v825 = vsub.s32 0, %v824
  %v826 = vrot.slane %v821, %v825
  %v829 = vsel %vm77, %v788, 0
  %v832 = vsel %vm77, %v789, 0
  %v835 = vsel %vm77, %v790, 0
  %v838 = vsel %vm77, %v791, 0
  %v841 = vsel %vm77, %v792, 0
  %v844 = vsel %vm77, %v793, 0
  %v847 = vsel %vm77, %v794, 0
  %v850 = vsel %vm77, %v795, 0
  %v853 = vsel %vm77, %v796, 0
  %v856 = vsel %vm77, %v797, 0
  %v859 = vsel %vm77, %v798, 0
  %v862 = vsel %vm77, %v799, 0
  %v865 = vsel %vm77, %v800, 0
  %v868 = vsel %vm77, %v801, 0
  %v871 = vsel %vm77, %v802, 0
  %v874 = vsel %vm77, %v803, 0
  %v877 = vsel %vm77, %v804, 0
  %v880 = vsel %vm77, %v805, 0
  %v883 = vsel %vm77, %v806, 0
  %v886 = vsel %vm77, %v807, 0
  %v889 = vsel %vm77, %v808, 0
  %v892 = vsel %vm77, %v809, 0
  %v895 = vsel %vm77, %v810, 0
  %v898 = vsel %vm77, %v811, 0
  %v901 = vsel %vm77, %v812, 0
  %903 = vmatprep.subr.mxu0 0.0
  %904 = vmatpush1.msra.mxu0 %v813
  %905 = vmatprep.subr.mxu0 0.0
  %906 = vmatpush1.msra.mxu0 %v814
  %907 = vmatprep.subr.mxu0 0.0
  %908 = vmatpush1.msra.mxu0 %v815
  %909 = vmatprep.subr.mxu0 0.0
  %910 = vmatpush1.msra.mxu0 %v816
  %911 = vmatprep.subr.mxu0 0.0
  %912 = vmatpush1.msra.mxu0 %v817
  %913 = vmatprep.subr.mxu0 0.0
  %914 = vmatpush1.msra.mxu0 %v818
  %915 = vmatprep.subr.mxu0 0.0
  %916 = vmatpush1.msra.mxu0 %v819
  %917 = vmatprep.subr.mxu0 0.0
  %918 = vmatpush1.msra.mxu0 %v820
  %919 = vmatprep.subr.mxu0 0.0
  %920 = vmatpush1.msra.mxu0 0.0
  %921 = vmatprep.subr.mxu0 0.0
  %922 = vmatpush1.msra.mxu0 0.0
  %923 = vmatprep.subr.mxu0 0.0
  %924 = vmatpush1.msra.mxu0 0.0
  %925 = vmatprep.subr.mxu0 0.0
  %926 = vmatpush1.msra.mxu0 0.0
  %927 = vmatprep.subr.mxu0 0.0
  %928 = vmatpush1.msra.mxu0 0.0
  %929 = vmatprep.subr.mxu0 0.0
  %930 = vmatpush1.msra.mxu0 0.0
  %931 = vmatprep.subr.mxu0 0.0
  %932 = vmatpush1.msra.mxu0 0.0
  %933 = vmatprep.subr.mxu0 0.0
  %934 = vmatpush1.msra.mxu0 0.0
  %935 = vmatprep.subr.mxu0 0.0
  %936 = vmatpush1.msra.mxu0 0.0
  %937 = vmatprep.subr.mxu0 0.0
  %938 = vmatpush1.msra.mxu0 0.0
  %939 = vmatprep.subr.mxu0 0.0
  %940 = vmatpush1.msra.mxu0 0.0
  %941 = vmatprep.subr.mxu0 0.0
  %942 = vmatpush1.msra.mxu0 0.0
  %943 = vmatprep.subr.mxu0 0.0
  %944 = vmatpush1.msra.mxu0 0.0
  %945 = vmatprep.subr.mxu0 0.0
  %946 = vmatpush1.msra.mxu0 0.0
  %947 = vmatprep.subr.mxu0 0.0
  %948 = vmatpush1.msra.mxu0 0.0
  %949 = vmatprep.subr.mxu0 0.0
  %950 = vmatpush1.msra.mxu0 0.0
  %951 = vmatprep.subr.mxu0 0.0
  %952 = vmatpush1.msra.mxu0 0.0
  %953 = vmatprep.subr.mxu0 0.0
  %954 = vmatpush1.msra.mxu0 0.0
  %955 = vmatprep.subr.mxu0 0.0
  %956 = vmatpush1.msra.mxu0 0.0
  %957 = vmatprep.subr.mxu0 0.0
  %958 = vmatpush1.msra.mxu0 0.0
  %959 = vmatprep.subr.mxu0 0.0
  %960 = vmatpush1.msra.mxu0 0.0
  %961 = vmatprep.subr.mxu0 0.0
  %962 = vmatpush1.msra.mxu0 0.0
  %963 = vmatprep.subr.mxu0 0.0
  %964 = vmatpush1.msra.mxu0 0.0
  %965 = vmatprep.subr.mxu0 0.0
  %966 = vmatpush1.msra.mxu0 0.0
  %967 = vmatprep.mubr.f32.mxu0 0.0
  %968 = vmatmul.mubr.f32.gmra.mrb[0].mxu0 %v829
  %v969 = vpop.f32.mrb[0].mxu0
  %v970 = vadd.f32 %v826, %v969
  %v971 = vpop.f32.mrb[0].mxu0
  %972 = vmatprep.mubr.f32.mxu0 0.0
  %973 = vmatmul.mubr.f32.gmra.mrb[0].mxu0 %v832
  %v974 = vpop.f32.mrb[0].mxu0
  %v975 = vadd.f32 %v826, %v974
  %v976 = vpop.f32.mrb[0].mxu0
  %977 = vmatprep.mubr.f32.mxu0 0.0
  %978 = vmatmul.mubr.f32.gmra.mrb[0].mxu0 %v835
  %v979 = vpop.f32.mrb[0].mxu0
  %v980 = vadd.f32 %v826, %v979
  %v981 = vpop.f32.mrb[0].mxu0
  %982 = vmatprep.mubr.f32.mxu0 0.0
  %983 = vmatmul.mubr.f32.gmra.mrb[0].mxu0 %v838
  %v984 = vpop.f32.mrb[0].mxu0
  %v985 = vadd.f32 %v826, %v984
  %v986 = vpop.f32.mrb[0].mxu0
  %987 = vmatprep.mubr.f32.mxu0 0.0
  %988 = vmatmul.mubr.f32.gmra.mrb[0].mxu0 %v841
  %v989 = vpop.f32.mrb[0].mxu0
  %v990 = vadd.f32 %v826, %v989
  %v991 = vpop.f32.mrb[0].mxu0
  %992 = vmatprep.mubr.f32.mxu0 0.0
  %993 = vmatmul.mubr.f32.gmra.mrb[0].mxu0 %v844
  %v994 = vpop.f32.mrb[0].mxu0
  %v995 = vadd.f32 %v826, %v994
  %v996 = vpop.f32.mrb[0].mxu0
  %997 = vmatprep.mubr.f32.mxu0 0.0
  %998 = vmatmul.mubr.f32.gmra.mrb[0].mxu0 %v847
  %v999 = vpop.f32.mrb[0].mxu0
  %v1000 = vadd.f32 %v826, %v999
  %v1001 = vpop.f32.mrb[0].mxu0
  %1002 = vmatprep.mubr.f32.mxu0 0.0
  %1003 = vmatmul.mubr.f32.gmra.mrb[0].mxu0 %v850
  %v1004 = vpop.f32.mrb[0].mxu0
  %v1005 = vadd.f32 %v826, %v1004
  %v1006 = vpop.f32.mrb[0].mxu0
  %1007 = vmatprep.mubr.f32.mxu0 0.0
  %1008 = vmatmul.mubr.f32.gmra.mrb[0].mxu0 %v853
  %v1009 = vpop.f32.mrb[0].mxu0
  %v1010 = vadd.f32 %v826, %v1009
  %v1011 = vpop.f32.mrb[0].mxu0
  %1012 = vmatprep.mubr.f32.mxu0 0.0
  %1013 = vmatmul.mubr.f32.gmra.mrb[0].mxu0 %v856
  %v1014 = vpop.f32.mrb[0].mxu0
  %v1015 = vadd.f32 %v826, %v1014
  %v1016 = vpop.f32.mrb[0].mxu0
  %1017 = vmatprep.mubr.f32.mxu0 0.0
  %1018 = vmatmul.mubr.f32.gmra.mrb[0].mxu0 %v859
  %v1019 = vpop.f32.mrb[0].mxu0
  %v1020 = vadd.f32 %v826, %v1019
  %v1021 = vpop.f32.mrb[0].mxu0
  %1022 = vmatprep.mubr.f32.mxu0 0.0
  %1023 = vmatmul.mubr.f32.gmra.mrb[0].mxu0 %v862
  %v1024 = vpop.f32.mrb[0].mxu0
  %v1025 = vadd.f32 %v826, %v1024
  %v1026 = vpop.f32.mrb[0].mxu0
  %1027 = vmatprep.mubr.f32.mxu0 0.0
  %1028 = vmatmul.mubr.f32.gmra.mrb[0].mxu0 %v865
  %v1029 = vpop.f32.mrb[0].mxu0
  %v1030 = vadd.f32 %v826, %v1029
  %v1031 = vpop.f32.mrb[0].mxu0
  %1032 = vmatprep.mubr.f32.mxu0 0.0
  %1033 = vmatmul.mubr.f32.gmra.mrb[0].mxu0 %v868
  %v1034 = vpop.f32.mrb[0].mxu0
  %v1035 = vadd.f32 %v826, %v1034
  %v1036 = vpop.f32.mrb[0].mxu0
  %1037 = vmatprep.mubr.f32.mxu0 0.0
  %1038 = vmatmul.mubr.f32.gmra.mrb[0].mxu0 %v871
  %v1039 = vpop.f32.mrb[0].mxu0
  %v1040 = vadd.f32 %v826, %v1039
  %v1041 = vpop.f32.mrb[0].mxu0
  %1042 = vmatprep.mubr.f32.mxu0 0.0
  %1043 = vmatmul.mubr.f32.gmra.mrb[0].mxu0 %v874
  %v1044 = vpop.f32.mrb[0].mxu0
  %v1045 = vadd.f32 %v826, %v1044
  %v1046 = vpop.f32.mrb[0].mxu0
  %1047 = vmatprep.mubr.f32.mxu0 0.0
  %1048 = vmatmul.mubr.f32.gmra.mrb[0].mxu0 %v877
  %v1049 = vpop.f32.mrb[0].mxu0
  %v1050 = vadd.f32 %v826, %v1049
  %v1051 = vpop.f32.mrb[0].mxu0
  %1052 = vmatprep.mubr.f32.mxu0 0.0
  %1053 = vmatmul.mubr.f32.gmra.mrb[0].mxu0 %v880
  %v1054 = vpop.f32.mrb[0].mxu0
  %v1055 = vadd.f32 %v826, %v1054
  %v1056 = vpop.f32.mrb[0].mxu0
  %1057 = vmatprep.mubr.f32.mxu0 0.0
  %1058 = vmatmul.mubr.f32.gmra.mrb[0].mxu0 %v883
  %v1059 = vpop.f32.mrb[0].mxu0
  %v1060 = vadd.f32 %v826, %v1059
  %v1061 = vpop.f32.mrb[0].mxu0
  %1062 = vmatprep.mubr.f32.mxu0 0.0
  %1063 = vmatmul.mubr.f32.gmra.mrb[0].mxu0 %v886
  %v1064 = vpop.f32.mrb[0].mxu0
  %v1065 = vadd.f32 %v826, %v1064
  %v1066 = vpop.f32.mrb[0].mxu0
  %1067 = vmatprep.mubr.f32.mxu0 0.0
  %1068 = vmatmul.mubr.f32.gmra.mrb[0].mxu0 %v889
  %v1069 = vpop.f32.mrb[0].mxu0
  %v1070 = vadd.f32 %v826, %v1069
  %v1071 = vpop.f32.mrb[0].mxu0
  %1072 = vmatprep.mubr.f32.mxu0 0.0
  %1073 = vmatmul.mubr.f32.gmra.mrb[0].mxu0 %v892
  %v1074 = vpop.f32.mrb[0].mxu0
  %v1075 = vadd.f32 %v826, %v1074
  %v1076 = vpop.f32.mrb[0].mxu0
  %1077 = vmatprep.mubr.f32.mxu0 0.0
  %1078 = vmatmul.mubr.f32.gmra.mrb[0].mxu0 %v895
  %v1079 = vpop.f32.mrb[0].mxu0
  %v1080 = vadd.f32 %v826, %v1079
  %v1081 = vpop.f32.mrb[0].mxu0
  %1082 = vmatprep.mubr.f32.mxu0 0.0
  %1083 = vmatmul.mubr.f32.gmra.mrb[0].mxu0 %v898
  %v1084 = vpop.f32.mrb[0].mxu0
  %v1085 = vadd.f32 %v826, %v1084
  %v1086 = vpop.f32.mrb[0].mxu0
  %1087 = vmatprep.mubr.f32.mxu0 0.0
  %1088 = vmatmul.mubr.f32.gmra.mrb[0].mxu0 %v901
  %v1089 = vpop.f32.mrb[0].mxu0
  %v1090 = vadd.f32 %v826, %v1089
  %v1091 = vpop.f32.mrb[0].mxu0
  %1092 = vdwg.mxu0
  %v1093 = vld [vmem:[%s5] sm:$0x1]
  %v1094 = vld [vmem:[%s6] sm:$0x1]
  %vm1095 = vcmask 130048
  %v1096 = vsel %vm1095, %v970, 0.0
  %1097 = vadd.xlane.f32.xlu0 %v1096
  %v1098 = vpop.xlane.xlu0 %1097
  %v1099 = vsel %vm1095, %v975, 0.0
  %1100 = vadd.xlane.f32.xlu0 %v1099
  %v1101 = vpop.xlane.xlu0 %1100
  %v1102 = vsel %vm1095, %v980, 0.0
  %1103 = vadd.xlane.f32.xlu0 %v1102
  %v1104 = vpop.xlane.xlu0 %1103
  %v1105 = vsel %vm1095, %v985, 0.0
  %1106 = vadd.xlane.f32.xlu0 %v1105
  %v1107 = vpop.xlane.xlu0 %1106
  %v1108 = vsel %vm1095, %v990, 0.0
  %1109 = vadd.xlane.f32.xlu0 %v1108
  %v1110 = vpop.xlane.xlu0 %1109
  %v1111 = vsel %vm1095, %v995, 0.0
  %1112 = vadd.xlane.f32.xlu0 %v1111
  %v1113 = vpop.xlane.xlu0 %1112
  %v1114 = vsel %vm1095, %v1000, 0.0
  %1115 = vadd.xlane.f32.xlu0 %v1114
  %v1116 = vpop.xlane.xlu0 %1115
  %v1117 = vsel %vm1095, %v1005, 0.0
  %1118 = vadd.xlane.f32.xlu0 %v1117
  %v1119 = vpop.xlane.xlu0 %1118
  %v1120 = vsel %vm1095, %v1010, 0.0
  %1121 = vadd.xlane.f32.xlu0 %v1120
  %v1122 = vpop.xlane.xlu0 %1121
  %v1123 = vsel %vm1095, %v1015, 0.0
  %1124 = vadd.xlane.f32.xlu0 %v1123
  %v1125 = vpop.xlane.xlu0 %1124
  %v1126 = vsel %vm1095, %v1020, 0.0
  %1127 = vadd.xlane.f32.xlu0 %v1126
  %v1128 = vpop.xlane.xlu0 %1127
  %v1129 = vsel %vm1095, %v1025, 0.0
  %1130 = vadd.xlane.f32.xlu0 %v1129
  %v1131 = vpop.xlane.xlu0 %1130
  %v1132 = vsel %vm1095, %v1030, 0.0
  %1133 = vadd.xlane.f32.xlu0 %v1132
  %v1134 = vpop.xlane.xlu0 %1133
  %v1135 = vsel %vm1095, %v1035, 0.0
  %1136 = vadd.xlane.f32.xlu0 %v1135
  %v1137 = vpop.xlane.xlu0 %1136
  %v1138 = vsel %vm1095, %v1040, 0.0
  %1139 = vadd.xlane.f32.xlu0 %v1138
  %v1140 = vpop.xlane.xlu0 %1139
  %v1141 = vsel %vm1095, %v1045, 0.0
  %1142 = vadd.xlane.f32.xlu0 %v1141
  %v1143 = vpop.xlane.xlu0 %1142
  %v1144 = vsel %vm1095, %v1050, 0.0
  %1145 = vadd.xlane.f32.xlu0 %v1144
  %v1146 = vpop.xlane.xlu0 %1145
  %v1147 = vsel %vm1095, %v1055, 0.0
  %1148 = vadd.xlane.f32.xlu0 %v1147
  %v1149 = vpop.xlane.xlu0 %1148
  %v1150 = vsel %vm1095, %v1060, 0.0
  %1151 = vadd.xlane.f32.xlu0 %v1150
  %v1152 = vpop.xlane.xlu0 %1151
  %v1153 = vsel %vm1095, %v1065, 0.0
  %1154 = vadd.xlane.f32.xlu0 %v1153
  %v1155 = vpop.xlane.xlu0 %1154
  %v1156 = vsel %vm1095, %v1070, 0.0
  %1157 = vadd.xlane.f32.xlu0 %v1156
  %v1158 = vpop.xlane.xlu0 %1157
  %v1159 = vsel %vm1095, %v1075, 0.0
  %1160 = vadd.xlane.f32.xlu0 %v1159
  %v1161 = vpop.xlane.xlu0 %1160
  %v1162 = vsel %vm1095, %v1080, 0.0
  %1163 = vadd.xlane.f32.xlu0 %v1162
  %v1164 = vpop.xlane.xlu0 %1163
  %v1165 = vsel %vm1095, %v1085, 0.0
  %1166 = vadd.xlane.f32.xlu0 %v1165
  %v1167 = vpop.xlane.xlu0 %1166
  %v1168 = vsel %vm1095, %v1090, 0.0
  %1169 = vadd.xlane.f32.xlu0 %v1168
  %v1170 = vpop.xlane.xlu0 %1169
  %v1171 = vrcp.pop 16.0
  %v1172 = vmul.f32 %v1098, %v1171
  %v1173 = vmul.f32 %v1101, %v1171
  %v1174 = vmul.f32 %v1104, %v1171
  %v1175 = vmul.f32 %v1107, %v1171
  %v1176 = vmul.f32 %v1110, %v1171
  %v1177 = vmul.f32 %v1113, %v1171
  %v1178 = vmul.f32 %v1116, %v1171
  %v1179 = vmul.f32 %v1119, %v1171
  %v1180 = vmul.f32 %v1122, %v1171
  %v1181 = vmul.f32 %v1125, %v1171
  %v1182 = vmul.f32 %v1128, %v1171
  %v1183 = vmul.f32 %v1131, %v1171
  %v1184 = vmul.f32 %v1134, %v1171
  %v1185 = vmul.f32 %v1137, %v1171
  %v1186 = vmul.f32 %v1140, %v1171
  %v1187 = vmul.f32 %v1143, %v1171
  %v1188 = vmul.f32 %v1146, %v1171
  %v1189 = vmul.f32 %v1149, %v1171
  %v1190 = vmul.f32 %v1152, %v1171
  %v1191 = vmul.f32 %v1155, %v1171
  %v1192 = vmul.f32 %v1158, %v1171
  %v1193 = vmul.f32 %v1161, %v1171
  %v1194 = vmul.f32 %v1164, %v1171
  %v1195 = vmul.f32 %v1167, %v1171
  %v1196 = vmul.f32 %v1170, %v1171
  %v1197 = vsub.f32 %v970, %v1172
  %v1198 = vsub.f32 %v975, %v1173
  %v1199 = vsub.f32 %v980, %v1174
  %v1200 = vsub.f32 %v985, %v1175
  %v1201 = vsub.f32 %v990, %v1176
  %v1202 = vsub.f32 %v995, %v1177
  %v1203 = vsub.f32 %v1000, %v1178
  %v1204 = vsub.f32 %v1005, %v1179
  %v1205 = vsub.f32 %v1010, %v1180
  %v1206 = vsub.f32 %v1015, %v1181
  %v1207 = vsub.f32 %v1020, %v1182
  %v1208 = vsub.f32 %v1025, %v1183
  %v1209 = vsub.f32 %v1030, %v1184
  %v1210 = vsub.f32 %v1035, %v1185
  %v1211 = vsub.f32 %v1040, %v1186
  %v1212 = vsub.f32 %v1045, %v1187
  %v1213 = vsub.f32 %v1050, %v1188
  %v1214 = vsub.f32 %v1055, %v1189
  %v1215 = vsub.f32 %v1060, %v1190
  %v1216 = vsub.f32 %v1065, %v1191
  %v1217 = vsub.f32 %v1070, %v1192
  %v1218 = vsub.f32 %v1075, %v1193
  %v1219 = vsub.f32 %v1080, %v1194
  %v1220 = vsub.f32 %v1085, %v1195
  %v1221 = vsub.f32 %v1090, %v1196
  %v1222 = vmul.f32 %v1197, %v1197
  %v1223 = vmul.f32 %v1198, %v1198
  %v1224 = vmul.f32 %v1199, %v1199
  %v1225 = vmul.f32 %v1200, %v1200
  %v1226 = vmul.f32 %v1201, %v1201
  %v1227 = vmul.f32 %v1202, %v1202
  %v1228 = vmul.f32 %v1203, %v1203
  %v1229 = vmul.f32 %v1204, %v1204
  %v1230 = vmul.f32 %v1205, %v1205
  %v1231 = vmul.f32 %v1206, %v1206
  %v1232 = vmul.f32 %v1207, %v1207
  %v1233 = vmul.f32 %v1208, %v1208
  %v1234 = vmul.f32 %v1209, %v1209
  %v1235 = vmul.f32 %v1210, %v1210
  %v1236 = vmul.f32 %v1211, %v1211
  %v1237 = vmul.f32 %v1212, %v1212
  %v1238 = vmul.f32 %v1213, %v1213
  %v1239 = vmul.f32 %v1214, %v1214
  %v1240 = vmul.f32 %v1215, %v1215
  %v1241 = vmul.f32 %v1216, %v1216
  %v1242 = vmul.f32 %v1217, %v1217
  %v1243 = vmul.f32 %v1218, %v1218
  %v1244 = vmul.f32 %v1219, %v1219
  %v1245 = vmul.f32 %v1220, %v1220
  %v1246 = vmul.f32 %v1221, %v1221
  %v1247 = vsel %vm1095, %v1222, 0.0
  %1248 = vadd.xlane.f32.xlu0 %v1247
  %v1249 = vpop.xlane.xlu0 %1248
  %v1250 = vsel %vm1095, %v1223, 0.0
  %1251 = vadd.xlane.f32.xlu0 %v1250
  %v1252 = vpop.xlane.xlu0 %1251
  %v1253 = vsel %vm1095, %v1224, 0.0
  %1254 = vadd.xlane.f32.xlu0 %v1253
  %v1255 = vpop.xlane.xlu0 %1254
  %v1256 = vsel %vm1095, %v1225, 0.0
  %1257 = vadd.xlane.f32.xlu0 %v1256
  %v1258 = vpop.xlane.xlu0 %1257
  %v1259 = vsel %vm1095, %v1226, 0.0
  %1260 = vadd.xlane.f32.xlu0 %v1259
  %v1261 = vpop.xlane.xlu0 %1260
  %v1262 = vsel %vm1095, %v1227, 0.0
  %1263 = vadd.xlane.f32.xlu0 %v1262
  %v1264 = vpop.xlane.xlu0 %1263
  %v1265 = vsel %vm1095, %v1228, 0.0
  %1266 = vadd.xlane.f32.xlu0 %v1265
  %v1267 = vpop.xlane.xlu0 %1266
  %v1268 = vsel %vm1095, %v1229, 0.0
  %1269 = vadd.xlane.f32.xlu0 %v1268
  %v1270 = vpop.xlane.xlu0 %1269
  %v1271 = vsel %vm1095, %v1230, 0.0
  %1272 = vadd.xlane.f32.xlu0 %v1271
  %v1273 = vpop.xlane.xlu0 %1272
  %v1274 = vsel %vm1095, %v1231, 0.0
  %1275 = vadd.xlane.f32.xlu0 %v1274
  %v1276 = vpop.xlane.xlu0 %1275
  %v1277 = vsel %vm1095, %v1232, 0.0
  %1278 = vadd.xlane.f32.xlu0 %v1277
  %v1279 = vpop.xlane.xlu0 %1278
  %v1280 = vsel %vm1095, %v1233, 0.0
  %1281 = vadd.xlane.f32.xlu0 %v1280
  %v1282 = vpop.xlane.xlu0 %1281
  %v1283 = vsel %vm1095, %v1234, 0.0
  %1284 = vadd.xlane.f32.xlu0 %v1283
  %v1285 = vpop.xlane.xlu0 %1284
  %v1286 = vsel %vm1095, %v1235, 0.0
  %1287 = vadd.xlane.f32.xlu0 %v1286
  %v1288 = vpop.xlane.xlu0 %1287
  %v1289 = vsel %vm1095, %v1236, 0.0
  %1290 = vadd.xlane.f32.xlu0 %v1289
  %v1291 = vpop.xlane.xlu0 %1290
  %v1292 = vsel %vm1095, %v1237, 0.0
  %1293 = vadd.xlane.f32.xlu0 %v1292
  %v1294 = vpop.xlane.xlu0 %1293
  %v1295 = vsel %vm1095, %v1238, 0.0
  %1296 = vadd.xlane.f32.xlu0 %v1295
  %v1297 = vpop.xlane.xlu0 %1296
  %v1298 = vsel %vm1095, %v1239, 0.0
  %1299 = vadd.xlane.f32.xlu0 %v1298
  %v1300 = vpop.xlane.xlu0 %1299
  %v1301 = vsel %vm1095, %v1240, 0.0
  %1302 = vadd.xlane.f32.xlu0 %v1301
  %v1303 = vpop.xlane.xlu0 %1302
  %v1304 = vsel %vm1095, %v1241, 0.0
  %1305 = vadd.xlane.f32.xlu0 %v1304
  %v1306 = vpop.xlane.xlu0 %1305
  %v1307 = vsel %vm1095, %v1242, 0.0
  %1308 = vadd.xlane.f32.xlu0 %v1307
  %v1309 = vpop.xlane.xlu0 %1308
  %v1310 = vsel %vm1095, %v1243, 0.0
  %1311 = vadd.xlane.f32.xlu0 %v1310
  %v1312 = vpop.xlane.xlu0 %1311
  %v1313 = vsel %vm1095, %v1244, 0.0
  %1314 = vadd.xlane.f32.xlu0 %v1313
  %v1315 = vpop.xlane.xlu0 %1314
  %v1316 = vsel %vm1095, %v1245, 0.0
  %1317 = vadd.xlane.f32.xlu0 %v1316
  %v1318 = vpop.xlane.xlu0 %1317
  %v1319 = vsel %vm1095, %v1246, 0.0
  %1320 = vadd.xlane.f32.xlu0 %v1319
  %v1321 = vpop.xlane.xlu0 %1320
  %v1322 = vmul.f32 %v1249, %v1171
  %v1323 = vmul.f32 %v1252, %v1171
  %v1324 = vmul.f32 %v1255, %v1171
  %v1325 = vmul.f32 %v1258, %v1171
  %v1326 = vmul.f32 %v1261, %v1171
  %v1327 = vmul.f32 %v1264, %v1171
  %v1328 = vmul.f32 %v1267, %v1171
  %v1329 = vmul.f32 %v1270, %v1171
  %v1330 = vmul.f32 %v1273, %v1171
  %v1331 = vmul.f32 %v1276, %v1171
  %v1332 = vmul.f32 %v1279, %v1171
  %v1333 = vmul.f32 %v1282, %v1171
  %v1334 = vmul.f32 %v1285, %v1171
  %v1335 = vmul.f32 %v1288, %v1171
  %v1336 = vmul.f32 %v1291, %v1171
  %v1337 = vmul.f32 %v1294, %v1171
  %v1338 = vmul.f32 %v1297, %v1171
  %v1339 = vmul.f32 %v1300, %v1171
  %v1340 = vmul.f32 %v1303, %v1171
  %v1341 = vmul.f32 %v1306, %v1171
  %v1342 = vmul.f32 %v1309, %v1171
  %v1343 = vmul.f32 %v1312, %v1171
  %v1344 = vmul.f32 %v1315, %v1171
  %v1345 = vmul.f32 %v1318, %v1171
  %v1346 = vmul.f32 %v1321, %v1171
  %v1347 = vadd.f32 %v1322, 1e-05
  %v1348 = vadd.f32 %v1323, 1e-05
  %v1349 = vadd.f32 %v1324, 1e-05
  %v1350 = vadd.f32 %v1325, 1e-05
  %v1351 = vadd.f32 %v1326, 1e-05
  %v1352 = vadd.f32 %v1327, 1e-05
  %v1353 = vadd.f32 %v1328, 1e-05
  %v1354 = vadd.f32 %v1329, 1e-05
  %v1355 = vadd.f32 %v1330, 1e-05
  %v1356 = vadd.f32 %v1331, 1e-05
  %v1357 = vadd.f32 %v1332, 1e-05
  %v1358 = vadd.f32 %v1333, 1e-05
  %v1359 = vadd.f32 %v1334, 1e-05
  %v1360 = vadd.f32 %v1335, 1e-05
  %v1361 = vadd.f32 %v1336, 1e-05
  %v1362 = vadd.f32 %v1337, 1e-05
  %v1363 = vadd.f32 %v1338, 1e-05
  %v1364 = vadd.f32 %v1339, 1e-05
  %v1365 = vadd.f32 %v1340, 1e-05
  %v1366 = vadd.f32 %v1341, 1e-05
  %v1367 = vadd.f32 %v1342, 1e-05
  %v1368 = vadd.f32 %v1343, 1e-05
  %v1369 = vadd.f32 %v1344, 1e-05
  %v1370 = vadd.f32 %v1345, 1e-05
  %v1371 = vadd.f32 %v1346, 1e-05
  %v1372 = vrsqrt.pop %v1347
  %v1373 = vrsqrt.pop %v1348
  %v1374 = vrsqrt.pop %v1349
  %v1375 = vrsqrt.pop %v1350
  %v1376 = vrsqrt.pop %v1351
  %v1377 = vrsqrt.pop %v1352
  %v1378 = vrsqrt.pop %v1353
  %v1379 = vrsqrt.pop %v1354
  %v1380 = vrsqrt.pop %v1355
  %v1381 = vrsqrt.pop %v1356
  %v1382 = vrsqrt.pop %v1357
  %v1383 = vrsqrt.pop %v1358
  %v1384 = vrsqrt.pop %v1359
  %v1385 = vrsqrt.pop %v1360
  %v1386 = vrsqrt.pop %v1361
  %v1387 = vrsqrt.pop %v1362
  %v1388 = vrsqrt.pop %v1363
  %v1389 = vrsqrt.pop %v1364
  %v1390 = vrsqrt.pop %v1365
  %v1391 = vrsqrt.pop %v1366
  %v1392 = vrsqrt.pop %v1367
  %v1393 = vrsqrt.pop %v1368
  %v1394 = vrsqrt.pop %v1369
  %v1395 = vrsqrt.pop %v1370
  %v1396 = vrsqrt.pop %v1371
  %v1397 = vmul.f32 %v1197, %v1372
  %v1398 = vmul.f32 %v1198, %v1373
  %v1399 = vmul.f32 %v1199, %v1374
  %v1400 = vmul.f32 %v1200, %v1375
  %v1401 = vmul.f32 %v1201, %v1376
  %v1402 = vmul.f32 %v1202, %v1377
  %v1403 = vmul.f32 %v1203, %v1378
  %v1404 = vmul.f32 %v1204, %v1379
  %v1405 = vmul.f32 %v1205, %v1380
  %v1406 = vmul.f32 %v1206, %v1381
  %v1407 = vmul.f32 %v1207, %v1382
  %v1408 = vmul.f32 %v1208, %v1383
  %v1409 = vmul.f32 %v1209, %v1384
  %v1410 = vmul.f32 %v1210, %v1385
  %v1411 = vmul.f32 %v1211, %v1386
  %v1412 = vmul.f32 %v1212, %v1387
  %v1413 = vmul.f32 %v1213, %v1388
  %v1414 = vmul.f32 %v1214, %v1389
  %v1415 = vmul.f32 %v1215, %v1390
  %v1416 = vmul.f32 %v1216, %v1391
  %v1417 = vmul.f32 %v1217, %v1392
  %v1418 = vmul.f32 %v1218, %v1393
  %v1419 = vmul.f32 %v1219, %v1394
  %v1420 = vmul.f32 %v1220, %v1395
  %v1421 = vmul.f32 %v1221, %v1396
  %v1423 = vlaneseq
  %v1424 = vshrl.u32 %v1423, 7
  %v1425 = vsub.s32 0, %v1424
  %v1426 = vrot.slane %v1093, %v1425
  %v1428 = vmul.f32 %v1397, %v1426
  %v1429 = vmul.f32 %v1398, %v1426
  %v1430 = vmul.f32 %v1399, %v1426
  %v1431 = vmul.f32 %v1400, %v1426
  %v1432 = vmul.f32 %v1401, %v1426
  %v1433 = vmul.f32 %v1402, %v1426
  %v1434 = vmul.f32 %v1403, %v1426
  %v1435 = vmul.f32 %v1404, %v1426
  %v1436 = vmul.f32 %v1405, %v1426
  %v1437 = vmul.f32 %v1406, %v1426
  %v1438 = vmul.f32 %v1407, %v1426
  %v1439 = vmul.f32 %v1408, %v1426
  %v1440 = vmul.f32 %v1409, %v1426
  %v1441 = vmul.f32 %v1410, %v1426
  %v1442 = vmul.f32 %v1411, %v1426
  %v1443 = vmul.f32 %v1412, %v1426
  %v1444 = vmul.f32 %v1413, %v1426
  %v1445 = vmul.f32 %v1414, %v1426
  %v1446 = vmul.f32 %v1415, %v1426
  %v1447 = vmul.f32 %v1416, %v1426
  %v1448 = vmul.f32 %v1417, %v1426
  %v1449 = vmul.f32 %v1418, %v1426
  %v1450 = vmul.f32 %v1419, %v1426
  %v1451 = vmul.f32 %v1420, %v1426
  %v1452 = vmul.f32 %v1421, %v1426
  %v1454 = vlaneseq
  %v1455 = vshrl.u32 %v1454, 7
  %v1456 = vsub.s32 0, %v1455
  %v1457 = vrot.slane %v1094, %v1456
  %v1459 = vadd.f32 %v1428, %v1457
  %v1460 = vadd.f32 %v1429, %v1457
  %v1461 = vadd.f32 %v1430, %v1457
  %v1462 = vadd.f32 %v1431, %v1457
  %v1463 = vadd.f32 %v1432, %v1457
  %v1464 = vadd.f32 %v1433, %v1457
  %v1465 = vadd.f32 %v1434, %v1457
  %v1466 = vadd.f32 %v1435, %v1457
  %v1467 = vadd.f32 %v1436, %v1457
  %v1468 = vadd.f32 %v1437, %v1457
  %v1469 = vadd.f32 %v1438, %v1457
  %v1470 = vadd.f32 %v1439, %v1457
  %v1471 = vadd.f32 %v1440, %v1457
  %v1472 = vadd.f32 %v1441, %v1457
  %v1473 = vadd.f32 %v1442, %v1457
  %v1474 = vadd.f32 %v1443, %v1457
  %v1475 = vadd.f32 %v1444, %v1457
  %v1476 = vadd.f32 %v1445, %v1457
  %v1477 = vadd.f32 %v1446, %v1457
  %v1478 = vadd.f32 %v1447, %v1457
  %v1479 = vadd.f32 %v1448, %v1457
  %v1480 = vadd.f32 %v1449, %v1457
  %v1481 = vadd.f32 %v1450, %v1457
  %v1482 = vadd.f32 %v1451, %v1457
  %v1483 = vadd.f32 %v1452, %v1457
  %v1484 = vmax.f32 %v1459, 0.0
  %v1485 = vmax.f32 %v1460, 0.0
  %v1486 = vmax.f32 %v1461, 0.0
  %v1487 = vmax.f32 %v1462, 0.0
  %v1488 = vmax.f32 %v1463, 0.0
  %v1489 = vmax.f32 %v1464, 0.0
  %v1490 = vmax.f32 %v1465, 0.0
  %v1491 = vmax.f32 %v1466, 0.0
  %v1492 = vmax.f32 %v1467, 0.0
  %v1493 = vmax.f32 %v1468, 0.0
  %v1494 = vmax.f32 %v1469, 0.0
  %v1495 = vmax.f32 %v1470, 0.0
  %v1496 = vmax.f32 %v1471, 0.0
  %v1497 = vmax.f32 %v1472, 0.0
  %v1498 = vmax.f32 %v1473, 0.0
  %v1499 = vmax.f32 %v1474, 0.0
  %v1500 = vmax.f32 %v1475, 0.0
  %v1501 = vmax.f32 %v1476, 0.0
  %v1502 = vmax.f32 %v1477, 0.0
  %v1503 = vmax.f32 %v1478, 0.0
  %v1504 = vmax.f32 %v1479, 0.0
  %v1505 = vmax.f32 %v1480, 0.0
  %v1506 = vmax.f32 %v1481, 0.0
  %v1507 = vmax.f32 %v1482, 0.0
  %v1508 = vmax.f32 %v1483, 0.0
  %v1509 = vld [vmem:[%s7] sm:$0xff]
  %v1510 = vld [vmem:[%s7 + $0x8] sm:$0xff]
  %v1511 = vld [vmem:[%s8] sm:$0x1]
  %v1513 = vlaneseq
  %v1514 = vshrl.u32 %v1513, 7
  %v1515 = vsub.s32 0, %v1514
  %v1516 = vrot.slane %v1511, %v1515
  %v1519 = vsel %vm1095, %v1484, 0
  %v1522 = vsel %vm1095, %v1485, 0
  %v1525 = vsel %vm1095, %v1486, 0
  %v1528 = vsel %vm1095, %v1487, 0
  %v1531 = vsel %vm1095, %v1488, 0
  %v1534 = vsel %vm1095, %v1489, 0
  %v1537 = vsel %vm1095, %v1490, 0
  %v1540 = vsel %vm1095, %v1491, 0
  %v1543 = vsel %vm1095, %v1492, 0
  %v1546 = vsel %vm1095, %v1493, 0
  %v1549 = vsel %vm1095, %v1494, 0
  %v1552 = vsel %vm1095, %v1495, 0
  %v1555 = vsel %vm1095, %v1496, 0
  %v1558 = vsel %vm1095, %v1497, 0
  %v1561 = vsel %vm1095, %v1498, 0
  %v1564 = vsel %vm1095, %v1499, 0
  %v1567 = vsel %vm1095, %v1500, 0
  %v1570 = vsel %vm1095, %v1501, 0
  %v1573 = vsel %vm1095, %v1502, 0
  %v1576 = vsel %vm1095, %v1503, 0
  %v1579 = vsel %vm1095, %v1504, 0
  %v1582 = vsel %vm1095, %v1505, 0
  %v1585 = vsel %vm1095, %v1506, 0
  %v1588 = vsel %vm1095, %v1507, 0
  %v1591 = vsel %vm1095, %v1508, 0
  %1593 = vmatprep.subr.mxu0 0.0
  %1594 = vmatpush1.msra.mxu0 %v1509
  %1595 = vmatprep.subr.mxu0 0.0
  %1596 = vmatpush1.msra.mxu0 %v1510
  %1597 = vmatprep.subr.mxu0 0.0
  %1598 = vmatpush1.msra.mxu0 0.0
  %1599 = vmatprep.subr.mxu0 0.0
  %1600 = vmatpush1.msra.mxu0 0.0
  %1601 = vmatprep.subr.mxu0 0.0
  %1602 = vmatpush1.msra.mxu0 0.0
  %1603 = vmatprep.subr.mxu0 0.0
  %1604 = vmatpush1.msra.mxu0 0.0
  %1605 = vmatprep.subr.mxu0 0.0
  %1606 = vmatpush1.msra.mxu0 0.0
  %1607 = vmatprep.subr.mxu0 0.0
  %1608 = vmatpush1.msra.mxu0 0.0
  %1609 = vmatprep.subr.mxu0 0.0
  %1610 = vmatpush1.msra.mxu0 0.0
  %1611 = vmatprep.subr.mxu0 0.0
  %1612 = vmatpush1.msra.mxu0 0.0
  %1613 = vmatprep.subr.mxu0 0.0
  %1614 = vmatpush1.msra.mxu0 0.0
  %1615 = vmatprep.subr.mxu0 0.0
  %1616 = vmatpush1.msra.mxu0 0.0
  %1617 = vmatprep.subr.mxu0 0.0
  %1618 = vmatpush1.msra.mxu0 0.0
  %1619 = vmatprep.subr.mxu0 0.0
  %1620 = vmatpush1.msra.mxu0 0.0
  %1621 = vmatprep.subr.mxu0 0.0
  %1622 = vmatpush1.msra.mxu0 0.0
  %1623 = vmatprep.subr.mxu0 0.0
  %1624 = vmatpush1.msra.mxu0 0.0
  %1625 = vmatprep.subr.mxu0 0.0
  %1626 = vmatpush1.msra.mxu0 0.0
  %1627 = vmatprep.subr.mxu0 0.0
  %1628 = vmatpush1.msra.mxu0 0.0
  %1629 = vmatprep.subr.mxu0 0.0
  %1630 = vmatpush1.msra.mxu0 0.0
  %1631 = vmatprep.subr.mxu0 0.0
  %1632 = vmatpush1.msra.mxu0 0.0
  %1633 = vmatprep.subr.mxu0 0.0
  %1634 = vmatpush1.msra.mxu0 0.0
  %1635 = vmatprep.subr.mxu0 0.0
  %1636 = vmatpush1.msra.mxu0 0.0
  %1637 = vmatprep.subr.mxu0 0.0
  %1638 = vmatpush1.msra.mxu0 0.0
  %1639 = vmatprep.subr.mxu0 0.0
  %1640 = vmatpush1.msra.mxu0 0.0
  %1641 = vmatprep.subr.mxu0 0.0
  %1642 = vmatpush1.msra.mxu0 0.0
  %1643 = vmatprep.subr.mxu0 0.0
  %1644 = vmatpush1.msra.mxu0 0.0
  %1645 = vmatprep.subr.mxu0 0.0
  %1646 = vmatpush1.msra.mxu0 0.0
  %1647 = vmatprep.subr.mxu0 0.0
  %1648 = vmatpush1.msra.mxu0 0.0
  %1649 = vmatprep.subr.mxu0 0.0
  %1650 = vmatpush1.msra.mxu0 0.0
  %1651 = vmatprep.subr.mxu0 0.0
  %1652 = vmatpush1.msra.mxu0 0.0
  %1653 = vmatprep.subr.mxu0 0.0
  %1654 = vmatpush1.msra.mxu0 0.0
  %1655 = vmatprep.subr.mxu0 0.0
  %1656 = vmatpush1.msra.mxu0 0.0
  %1657 = vmatprep.mubr.f32.mxu0 0.0
  %1658 = vmatmul.mubr.f32.gmra.mrb[0].mxu0 %v1519
  %v1659 = vpop.f32.mrb[0].mxu0
  %v1660 = vadd.f32 %v1516, %v1659
  %v1661 = vpop.f32.mrb[0].mxu0
  %1662 = vmatprep.mubr.f32.mxu0 0.0
  %1663 = vmatmul.mubr.f32.gmra.mrb[0].mxu0 %v1522
  %v1664 = vpop.f32.mrb[0].mxu0
  %v1665 = vadd.f32 %v1516, %v1664
  %v1666 = vpop.f32.mrb[0].mxu0
  %1667 = vmatprep.mubr.f32.mxu0 0.0
  %1668 = vmatmul.mubr.f32.gmra.mrb[0].mxu0 %v1525
  %v1669 = vpop.f32.mrb[0].mxu0
  %v1670 = vadd.f32 %v1516, %v1669
  %v1671 = vpop.f32.mrb[0].mxu0
  %1672 = vmatprep.mubr.f32.mxu0 0.0
  %1673 = vmatmul.mubr.f32.gmra.mrb[0].mxu0 %v1528
  %v1674 = vpop.f32.mrb[0].mxu0
  %v1675 = vadd.f32 %v1516, %v1674
  %v1676 = vpop.f32.mrb[0].mxu0
  %1677 = vmatprep.mubr.f32.mxu0 0.0
  %1678 = vmatmul.mubr.f32.gmra.mrb[0].mxu0 %v1531
  %v1679 = vpop.f32.mrb[0].mxu0
  %v1680 = vadd.f32 %v1516, %v1679
  %v1681 = vpop.f32.mrb[0].mxu0
  %1682 = vmatprep.mubr.f32.mxu0 0.0
  %1683 = vmatmul.mubr.f32.gmra.mrb[0].mxu0 %v1534
  %v1684 = vpop.f32.mrb[0].mxu0
  %v1685 = vadd.f32 %v1516, %v1684
  %v1686 = vpop.f32.mrb[0].mxu0
  %1687 = vmatprep.mubr.f32.mxu0 0.0
  %1688 = vmatmul.mubr.f32.gmra.mrb[0].mxu0 %v1537
  %v1689 = vpop.f32.mrb[0].mxu0
  %v1690 = vadd.f32 %v1516, %v1689
  %v1691 = vpop.f32.mrb[0].mxu0
  %1692 = vmatprep.mubr.f32.mxu0 0.0
  %1693 = vmatmul.mubr.f32.gmra.mrb[0].mxu0 %v1540
  %v1694 = vpop.f32.mrb[0].mxu0
  %v1695 = vadd.f32 %v1516, %v1694
  %v1696 = vpop.f32.mrb[0].mxu0
  %1697 = vmatprep.mubr.f32.mxu0 0.0
  %1698 = vmatmul.mubr.f32.gmra.mrb[0].mxu0 %v1543
  %v1699 = vpop.f32.mrb[0].mxu0
  %v1700 = vadd.f32 %v1516, %v1699
  %v1701 = vpop.f32.mrb[0].mxu0
  %1702 = vmatprep.mubr.f32.mxu0 0.0
  %1703 = vmatmul.mubr.f32.gmra.mrb[0].mxu0 %v1546
  %v1704 = vpop.f32.mrb[0].mxu0
  %v1705 = vadd.f32 %v1516, %v1704
  %v1706 = vpop.f32.mrb[0].mxu0
  %1707 = vmatprep.mubr.f32.mxu0 0.0
  %1708 = vmatmul.mubr.f32.gmra.mrb[0].mxu0 %v1549
  %v1709 = vpop.f32.mrb[0].mxu0
  %v1710 = vadd.f32 %v1516, %v1709
  %v1711 = vpop.f32.mrb[0].mxu0
  %1712 = vmatprep.mubr.f32.mxu0 0.0
  %1713 = vmatmul.mubr.f32.gmra.mrb[0].mxu0 %v1552
  %v1714 = vpop.f32.mrb[0].mxu0
  %v1715 = vadd.f32 %v1516, %v1714
  %v1716 = vpop.f32.mrb[0].mxu0
  %1717 = vmatprep.mubr.f32.mxu0 0.0
  %1718 = vmatmul.mubr.f32.gmra.mrb[0].mxu0 %v1555
  %v1719 = vpop.f32.mrb[0].mxu0
  %v1720 = vadd.f32 %v1516, %v1719
  %v1721 = vpop.f32.mrb[0].mxu0
  %1722 = vmatprep.mubr.f32.mxu0 0.0
  %1723 = vmatmul.mubr.f32.gmra.mrb[0].mxu0 %v1558
  %v1724 = vpop.f32.mrb[0].mxu0
  %v1725 = vadd.f32 %v1516, %v1724
  %v1726 = vpop.f32.mrb[0].mxu0
  %1727 = vmatprep.mubr.f32.mxu0 0.0
  %1728 = vmatmul.mubr.f32.gmra.mrb[0].mxu0 %v1561
  %v1729 = vpop.f32.mrb[0].mxu0
  %v1730 = vadd.f32 %v1516, %v1729
  %v1731 = vpop.f32.mrb[0].mxu0
  %1732 = vmatprep.mubr.f32.mxu0 0.0
  %1733 = vmatmul.mubr.f32.gmra.mrb[0].mxu0 %v1564
  %v1734 = vpop.f32.mrb[0].mxu0
  %v1735 = vadd.f32 %v1516, %v1734
  %v1736 = vpop.f32.mrb[0].mxu0
  %1737 = vmatprep.mubr.f32.mxu0 0.0
  %1738 = vmatmul.mubr.f32.gmra.mrb[0].mxu0 %v1567
  %v1739 = vpop.f32.mrb[0].mxu0
  %v1740 = vadd.f32 %v1516, %v1739
  %v1741 = vpop.f32.mrb[0].mxu0
  %1742 = vmatprep.mubr.f32.mxu0 0.0
  %1743 = vmatmul.mubr.f32.gmra.mrb[0].mxu0 %v1570
  %v1744 = vpop.f32.mrb[0].mxu0
  %v1745 = vadd.f32 %v1516, %v1744
  %v1746 = vpop.f32.mrb[0].mxu0
  %1747 = vmatprep.mubr.f32.mxu0 0.0
  %1748 = vmatmul.mubr.f32.gmra.mrb[0].mxu0 %v1573
  %v1749 = vpop.f32.mrb[0].mxu0
  %v1750 = vadd.f32 %v1516, %v1749
  %v1751 = vpop.f32.mrb[0].mxu0
  %1752 = vmatprep.mubr.f32.mxu0 0.0
  %1753 = vmatmul.mubr.f32.gmra.mrb[0].mxu0 %v1576
  %v1754 = vpop.f32.mrb[0].mxu0
  %v1755 = vadd.f32 %v1516, %v1754
  %v1756 = vpop.f32.mrb[0].mxu0
  %1757 = vmatprep.mubr.f32.mxu0 0.0
  %1758 = vmatmul.mubr.f32.gmra.mrb[0].mxu0 %v1579
  %v1759 = vpop.f32.mrb[0].mxu0
  %v1760 = vadd.f32 %v1516, %v1759
  %v1761 = vpop.f32.mrb[0].mxu0
  %1762 = vmatprep.mubr.f32.mxu0 0.0
  %1763 = vmatmul.mubr.f32.gmra.mrb[0].mxu0 %v1582
  %v1764 = vpop.f32.mrb[0].mxu0
  %v1765 = vadd.f32 %v1516, %v1764
  %v1766 = vpop.f32.mrb[0].mxu0
  %1767 = vmatprep.mubr.f32.mxu0 0.0
  %1768 = vmatmul.mubr.f32.gmra.mrb[0].mxu0 %v1585
  %v1769 = vpop.f32.mrb[0].mxu0
  %v1770 = vadd.f32 %v1516, %v1769
  %v1771 = vpop.f32.mrb[0].mxu0
  %1772 = vmatprep.mubr.f32.mxu0 0.0
  %1773 = vmatmul.mubr.f32.gmra.mrb[0].mxu0 %v1588
  %v1774 = vpop.f32.mrb[0].mxu0
  %v1775 = vadd.f32 %v1516, %v1774
  %v1776 = vpop.f32.mrb[0].mxu0
  %1777 = vmatprep.mubr.f32.mxu0 0.0
  %1778 = vmatmul.mubr.f32.gmra.mrb[0].mxu0 %v1591
  %v1779 = vpop.f32.mrb[0].mxu0
  %v1780 = vadd.f32 %v1516, %v1779
  %v1781 = vpop.f32.mrb[0].mxu0
  %1782 = vdwg.mxu0
  %v1783 = vld [vmem:[%s9] sm:$0x1]
  %v1784 = vld [vmem:[%s10] sm:$0x1]
  %vm1785 = vcmask 31744
  %v1786 = vsel %vm1785, %v1660, 0.0
  %1787 = vadd.xlane.f32.xlu0 %v1786
  %v1788 = vpop.xlane.xlu0 %1787
  %v1789 = vsel %vm1785, %v1665, 0.0
  %1790 = vadd.xlane.f32.xlu0 %v1789
  %v1791 = vpop.xlane.xlu0 %1790
  %v1792 = vsel %vm1785, %v1670, 0.0
  %1793 = vadd.xlane.f32.xlu0 %v1792
  %v1794 = vpop.xlane.xlu0 %1793
  %v1795 = vsel %vm1785, %v1675, 0.0
  %1796 = vadd.xlane.f32.xlu0 %v1795
  %v1797 = vpop.xlane.xlu0 %1796
  %v1798 = vsel %vm1785, %v1680, 0.0
  %1799 = vadd.xlane.f32.xlu0 %v1798
  %v1800 = vpop.xlane.xlu0 %1799
  %v1801 = vsel %vm1785, %v1685, 0.0
  %1802 = vadd.xlane.f32.xlu0 %v1801
  %v1803 = vpop.xlane.xlu0 %1802
  %v1804 = vsel %vm1785, %v1690, 0.0
  %1805 = vadd.xlane.f32.xlu0 %v1804
  %v1806 = vpop.xlane.xlu0 %1805
  %v1807 = vsel %vm1785, %v1695, 0.0
  %1808 = vadd.xlane.f32.xlu0 %v1807
  %v1809 = vpop.xlane.xlu0 %1808
  %v1810 = vsel %vm1785, %v1700, 0.0
  %1811 = vadd.xlane.f32.xlu0 %v1810
  %v1812 = vpop.xlane.xlu0 %1811
  %v1813 = vsel %vm1785, %v1705, 0.0
  %1814 = vadd.xlane.f32.xlu0 %v1813
  %v1815 = vpop.xlane.xlu0 %1814
  %v1816 = vsel %vm1785, %v1710, 0.0
  %1817 = vadd.xlane.f32.xlu0 %v1816
  %v1818 = vpop.xlane.xlu0 %1817
  %v1819 = vsel %vm1785, %v1715, 0.0
  %1820 = vadd.xlane.f32.xlu0 %v1819
  %v1821 = vpop.xlane.xlu0 %1820
  %v1822 = vsel %vm1785, %v1720, 0.0
  %1823 = vadd.xlane.f32.xlu0 %v1822
  %v1824 = vpop.xlane.xlu0 %1823
  %v1825 = vsel %vm1785, %v1725, 0.0
  %1826 = vadd.xlane.f32.xlu0 %v1825
  %v1827 = vpop.xlane.xlu0 %1826
  %v1828 = vsel %vm1785, %v1730, 0.0
  %1829 = vadd.xlane.f32.xlu0 %v1828
  %v1830 = vpop.xlane.xlu0 %1829
  %v1831 = vsel %vm1785, %v1735, 0.0
  %1832 = vadd.xlane.f32.xlu0 %v1831
  %v1833 = vpop.xlane.xlu0 %1832
  %v1834 = vsel %vm1785, %v1740, 0.0
  %1835 = vadd.xlane.f32.xlu0 %v1834
  %v1836 = vpop.xlane.xlu0 %1835
  %v1837 = vsel %vm1785, %v1745, 0.0
  %1838 = vadd.xlane.f32.xlu0 %v1837
  %v1839 = vpop.xlane.xlu0 %1838
  %v1840 = vsel %vm1785, %v1750, 0.0
  %1841 = vadd.xlane.f32.xlu0 %v1840
  %v1842 = vpop.xlane.xlu0 %1841
  %v1843 = vsel %vm1785, %v1755, 0.0
  %1844 = vadd.xlane.f32.xlu0 %v1843
  %v1845 = vpop.xlane.xlu0 %1844
  %v1846 = vsel %vm1785, %v1760, 0.0
  %1847 = vadd.xlane.f32.xlu0 %v1846
  %v1848 = vpop.xlane.xlu0 %1847
  %v1849 = vsel %vm1785, %v1765, 0.0
  %1850 = vadd.xlane.f32.xlu0 %v1849
  %v1851 = vpop.xlane.xlu0 %1850
  %v1852 = vsel %vm1785, %v1770, 0.0
  %1853 = vadd.xlane.f32.xlu0 %v1852
  %v1854 = vpop.xlane.xlu0 %1853
  %v1855 = vsel %vm1785, %v1775, 0.0
  %1856 = vadd.xlane.f32.xlu0 %v1855
  %v1857 = vpop.xlane.xlu0 %1856
  %v1858 = vsel %vm1785, %v1780, 0.0
  %1859 = vadd.xlane.f32.xlu0 %v1858
  %v1860 = vpop.xlane.xlu0 %1859
  %v1861 = vrcp.pop 4.0
  %v1862 = vmul.f32 %v1788, %v1861
  %v1863 = vmul.f32 %v1791, %v1861
  %v1864 = vmul.f32 %v1794, %v1861
  %v1865 = vmul.f32 %v1797, %v1861
  %v1866 = vmul.f32 %v1800, %v1861
  %v1867 = vmul.f32 %v1803, %v1861
  %v1868 = vmul.f32 %v1806, %v1861
  %v1869 = vmul.f32 %v1809, %v1861
  %v1870 = vmul.f32 %v1812, %v1861
  %v1871 = vmul.f32 %v1815, %v1861
  %v1872 = vmul.f32 %v1818, %v1861
  %v1873 = vmul.f32 %v1821, %v1861
  %v1874 = vmul.f32 %v1824, %v1861
  %v1875 = vmul.f32 %v1827, %v1861
  %v1876 = vmul.f32 %v1830, %v1861
  %v1877 = vmul.f32 %v1833, %v1861
  %v1878 = vmul.f32 %v1836, %v1861
  %v1879 = vmul.f32 %v1839, %v1861
  %v1880 = vmul.f32 %v1842, %v1861
  %v1881 = vmul.f32 %v1845, %v1861
  %v1882 = vmul.f32 %v1848, %v1861
  %v1883 = vmul.f32 %v1851, %v1861
  %v1884 = vmul.f32 %v1854, %v1861
  %v1885 = vmul.f32 %v1857, %v1861
  %v1886 = vmul.f32 %v1860, %v1861
  %v1887 = vsub.f32 %v1660, %v1862
  %v1888 = vsub.f32 %v1665, %v1863
  %v1889 = vsub.f32 %v1670, %v1864
  %v1890 = vsub.f32 %v1675, %v1865
  %v1891 = vsub.f32 %v1680, %v1866
  %v1892 = vsub.f32 %v1685, %v1867
  %v1893 = vsub.f32 %v1690, %v1868
  %v1894 = vsub.f32 %v1695, %v1869
  %v1895 = vsub.f32 %v1700, %v1870
  %v1896 = vsub.f32 %v1705, %v1871
  %v1897 = vsub.f32 %v1710, %v1872
  %v1898 = vsub.f32 %v1715, %v1873
  %v1899 = vsub.f32 %v1720, %v1874
  %v1900 = vsub.f32 %v1725, %v1875
  %v1901 = vsub.f32 %v1730, %v1876
  %v1902 = vsub.f32 %v1735, %v1877
  %v1903 = vsub.f32 %v1740, %v1878
  %v1904 = vsub.f32 %v1745, %v1879
  %v1905 = vsub.f32 %v1750, %v1880
  %v1906 = vsub.f32 %v1755, %v1881
  %v1907 = vsub.f32 %v1760, %v1882
  %v1908 = vsub.f32 %v1765, %v1883
  %v1909 = vsub.f32 %v1770, %v1884
  %v1910 = vsub.f32 %v1775, %v1885
  %v1911 = vsub.f32 %v1780, %v1886
  %v1912 = vmul.f32 %v1887, %v1887
  %v1913 = vmul.f32 %v1888, %v1888
  %v1914 = vmul.f32 %v1889, %v1889
  %v1915 = vmul.f32 %v1890, %v1890
  %v1916 = vmul.f32 %v1891, %v1891
  %v1917 = vmul.f32 %v1892, %v1892
  %v1918 = vmul.f32 %v1893, %v1893
  %v1919 = vmul.f32 %v1894, %v1894
  %v1920 = vmul.f32 %v1895, %v1895
  %v1921 = vmul.f32 %v1896, %v1896
  %v1922 = vmul.f32 %v1897, %v1897
  %v1923 = vmul.f32 %v1898, %v1898
  %v1924 = vmul.f32 %v1899, %v1899
  %v1925 = vmul.f32 %v1900, %v1900
  %v1926 = vmul.f32 %v1901, %v1901
  %v1927 = vmul.f32 %v1902, %v1902
  %v1928 = vmul.f32 %v1903, %v1903
  %v1929 = vmul.f32 %v1904, %v1904
  %v1930 = vmul.f32 %v1905, %v1905
  %v1931 = vmul.f32 %v1906, %v1906
  %v1932 = vmul.f32 %v1907, %v1907
  %v1933 = vmul.f32 %v1908, %v1908
  %v1934 = vmul.f32 %v1909, %v1909
  %v1935 = vmul.f32 %v1910, %v1910
  %v1936 = vmul.f32 %v1911, %v1911
  %v1937 = vsel %vm1785, %v1912, 0.0
  %1938 = vadd.xlane.f32.xlu0 %v1937
  %v1939 = vpop.xlane.xlu0 %1938
  %v1940 = vsel %vm1785, %v1913, 0.0
  %1941 = vadd.xlane.f32.xlu0 %v1940
  %v1942 = vpop.xlane.xlu0 %1941
  %v1943 = vsel %vm1785, %v1914, 0.0
  %1944 = vadd.xlane.f32.xlu0 %v1943
  %v1945 = vpop.xlane.xlu0 %1944
  %v1946 = vsel %vm1785, %v1915, 0.0
  %1947 = vadd.xlane.f32.xlu0 %v1946
  %v1948 = vpop.xlane.xlu0 %1947
  %v1949 = vsel %vm1785, %v1916, 0.0
  %1950 = vadd.xlane.f32.xlu0 %v1949
  %v1951 = vpop.xlane.xlu0 %1950
  %v1952 = vsel %vm1785, %v1917, 0.0
  %1953 = vadd.xlane.f32.xlu0 %v1952
  %v1954 = vpop.xlane.xlu0 %1953
  %v1955 = vsel %vm1785, %v1918, 0.0
  %1956 = vadd.xlane.f32.xlu0 %v1955
  %v1957 = vpop.xlane.xlu0 %1956
  %v1958 = vsel %vm1785, %v1919, 0.0
  %1959 = vadd.xlane.f32.xlu0 %v1958
  %v1960 = vpop.xlane.xlu0 %1959
  %v1961 = vsel %vm1785, %v1920, 0.0
  %1962 = vadd.xlane.f32.xlu0 %v1961
  %v1963 = vpop.xlane.xlu0 %1962
  %v1964 = vsel %vm1785, %v1921, 0.0
  %1965 = vadd.xlane.f32.xlu0 %v1964
  %v1966 = vpop.xlane.xlu0 %1965
  %v1967 = vsel %vm1785, %v1922, 0.0
  %1968 = vadd.xlane.f32.xlu0 %v1967
  %v1969 = vpop.xlane.xlu0 %1968
  %v1970 = vsel %vm1785, %v1923, 0.0
  %1971 = vadd.xlane.f32.xlu0 %v1970
  %v1972 = vpop.xlane.xlu0 %1971
  %v1973 = vsel %vm1785, %v1924, 0.0
  %1974 = vadd.xlane.f32.xlu0 %v1973
  %v1975 = vpop.xlane.xlu0 %1974
  %v1976 = vsel %vm1785, %v1925, 0.0
  %1977 = vadd.xlane.f32.xlu0 %v1976
  %v1978 = vpop.xlane.xlu0 %1977
  %v1979 = vsel %vm1785, %v1926, 0.0
  %1980 = vadd.xlane.f32.xlu0 %v1979
  %v1981 = vpop.xlane.xlu0 %1980
  %v1982 = vsel %vm1785, %v1927, 0.0
  %1983 = vadd.xlane.f32.xlu0 %v1982
  %v1984 = vpop.xlane.xlu0 %1983
  %v1985 = vsel %vm1785, %v1928, 0.0
  %1986 = vadd.xlane.f32.xlu0 %v1985
  %v1987 = vpop.xlane.xlu0 %1986
  %v1988 = vsel %vm1785, %v1929, 0.0
  %1989 = vadd.xlane.f32.xlu0 %v1988
  %v1990 = vpop.xlane.xlu0 %1989
  %v1991 = vsel %vm1785, %v1930, 0.0
  %1992 = vadd.xlane.f32.xlu0 %v1991
  %v1993 = vpop.xlane.xlu0 %1992
  %v1994 = vsel %vm1785, %v1931, 0.0
  %1995 = vadd.xlane.f32.xlu0 %v1994
  %v1996 = vpop.xlane.xlu0 %1995
  %v1997 = vsel %vm1785, %v1932, 0.0
  %1998 = vadd.xlane.f32.xlu0 %v1997
  %v1999 = vpop.xlane.xlu0 %1998
  %v2000 = vsel %vm1785, %v1933, 0.0
  %2001 = vadd.xlane.f32.xlu0 %v2000
  %v2002 = vpop.xlane.xlu0 %2001
  %v2003 = vsel %vm1785, %v1934, 0.0
  %2004 = vadd.xlane.f32.xlu0 %v2003
  %v2005 = vpop.xlane.xlu0 %2004
  %v2006 = vsel %vm1785, %v1935, 0.0
  %2007 = vadd.xlane.f32.xlu0 %v2006
  %v2008 = vpop.xlane.xlu0 %2007
  %v2009 = vsel %vm1785, %v1936, 0.0
  %2010 = vadd.xlane.f32.xlu0 %v2009
  %v2011 = vpop.xlane.xlu0 %2010
  %v2012 = vmul.f32 %v1939, %v1861
  %v2013 = vmul.f32 %v1942, %v1861
  %v2014 = vmul.f32 %v1945, %v1861
  %v2015 = vmul.f32 %v1948, %v1861
  %v2016 = vmul.f32 %v1951, %v1861
  %v2017 = vmul.f32 %v1954, %v1861
  %v2018 = vmul.f32 %v1957, %v1861
  %v2019 = vmul.f32 %v1960, %v1861
  %v2020 = vmul.f32 %v1963, %v1861
  %v2021 = vmul.f32 %v1966, %v1861
  %v2022 = vmul.f32 %v1969, %v1861
  %v2023 = vmul.f32 %v1972, %v1861
  %v2024 = vmul.f32 %v1975, %v1861
  %v2025 = vmul.f32 %v1978, %v1861
  %v2026 = vmul.f32 %v1981, %v1861
  %v2027 = vmul.f32 %v1984, %v1861
  %v2028 = vmul.f32 %v1987, %v1861
  %v2029 = vmul.f32 %v1990, %v1861
  %v2030 = vmul.f32 %v1993, %v1861
  %v2031 = vmul.f32 %v1996, %v1861
  %v2032 = vmul.f32 %v1999, %v1861
  %v2033 = vmul.f32 %v2002, %v1861
  %v2034 = vmul.f32 %v2005, %v1861
  %v2035 = vmul.f32 %v2008, %v1861
  %v2036 = vmul.f32 %v2011, %v1861
  %v2037 = vadd.f32 %v2012, 1e-05
  %v2038 = vadd.f32 %v2013, 1e-05
  %v2039 = vadd.f32 %v2014, 1e-05
  %v2040 = vadd.f32 %v2015, 1e-05
  %v2041 = vadd.f32 %v2016, 1e-05
  %v2042 = vadd.f32 %v2017, 1e-05
  %v2043 = vadd.f32 %v2018, 1e-05
  %v2044 = vadd.f32 %v2019, 1e-05
  %v2045 = vadd.f32 %v2020, 1e-05
  %v2046 = vadd.f32 %v2021, 1e-05
  %v2047 = vadd.f32 %v2022, 1e-05
  %v2048 = vadd.f32 %v2023, 1e-05
  %v2049 = vadd.f32 %v2024, 1e-05
  %v2050 = vadd.f32 %v2025, 1e-05
  %v2051 = vadd.f32 %v2026, 1e-05
  %v2052 = vadd.f32 %v2027, 1e-05
  %v2053 = vadd.f32 %v2028, 1e-05
  %v2054 = vadd.f32 %v2029, 1e-05
  %v2055 = vadd.f32 %v2030, 1e-05
  %v2056 = vadd.f32 %v2031, 1e-05
  %v2057 = vadd.f32 %v2032, 1e-05
  %v2058 = vadd.f32 %v2033, 1e-05
  %v2059 = vadd.f32 %v2034, 1e-05
  %v2060 = vadd.f32 %v2035, 1e-05
  %v2061 = vadd.f32 %v2036, 1e-05
  %v2062 = vrsqrt.pop %v2037
  %v2063 = vrsqrt.pop %v2038
  %v2064 = vrsqrt.pop %v2039
  %v2065 = vrsqrt.pop %v2040
  %v2066 = vrsqrt.pop %v2041
  %v2067 = vrsqrt.pop %v2042
  %v2068 = vrsqrt.pop %v2043
  %v2069 = vrsqrt.pop %v2044
  %v2070 = vrsqrt.pop %v2045
  %v2071 = vrsqrt.pop %v2046
  %v2072 = vrsqrt.pop %v2047
  %v2073 = vrsqrt.pop %v2048
  %v2074 = vrsqrt.pop %v2049
  %v2075 = vrsqrt.pop %v2050
  %v2076 = vrsqrt.pop %v2051
  %v2077 = vrsqrt.pop %v2052
  %v2078 = vrsqrt.pop %v2053
  %v2079 = vrsqrt.pop %v2054
  %v2080 = vrsqrt.pop %v2055
  %v2081 = vrsqrt.pop %v2056
  %v2082 = vrsqrt.pop %v2057
  %v2083 = vrsqrt.pop %v2058
  %v2084 = vrsqrt.pop %v2059
  %v2085 = vrsqrt.pop %v2060
  %v2086 = vrsqrt.pop %v2061
  %v2087 = vmul.f32 %v1887, %v2062
  %v2088 = vmul.f32 %v1888, %v2063
  %v2089 = vmul.f32 %v1889, %v2064
  %v2090 = vmul.f32 %v1890, %v2065
  %v2091 = vmul.f32 %v1891, %v2066
  %v2092 = vmul.f32 %v1892, %v2067
  %v2093 = vmul.f32 %v1893, %v2068
  %v2094 = vmul.f32 %v1894, %v2069
  %v2095 = vmul.f32 %v1895, %v2070
  %v2096 = vmul.f32 %v1896, %v2071
  %v2097 = vmul.f32 %v1897, %v2072
  %v2098 = vmul.f32 %v1898, %v2073
  %v2099 = vmul.f32 %v1899, %v2074
  %v2100 = vmul.f32 %v1900, %v2075
  %v2101 = vmul.f32 %v1901, %v2076
  %v2102 = vmul.f32 %v1902, %v2077
  %v2103 = vmul.f32 %v1903, %v2078
  %v2104 = vmul.f32 %v1904, %v2079
  %v2105 = vmul.f32 %v1905, %v2080
  %v2106 = vmul.f32 %v1906, %v2081
  %v2107 = vmul.f32 %v1907, %v2082
  %v2108 = vmul.f32 %v1908, %v2083
  %v2109 = vmul.f32 %v1909, %v2084
  %v2110 = vmul.f32 %v1910, %v2085
  %v2111 = vmul.f32 %v1911, %v2086
  %v2113 = vlaneseq
  %v2114 = vshrl.u32 %v2113, 7
  %v2115 = vsub.s32 0, %v2114
  %v2116 = vrot.slane %v1783, %v2115
  %v2118 = vmul.f32 %v2087, %v2116
  %v2119 = vmul.f32 %v2088, %v2116
  %v2120 = vmul.f32 %v2089, %v2116
  %v2121 = vmul.f32 %v2090, %v2116
  %v2122 = vmul.f32 %v2091, %v2116
  %v2123 = vmul.f32 %v2092, %v2116
  %v2124 = vmul.f32 %v2093, %v2116
  %v2125 = vmul.f32 %v2094, %v2116
  %v2126 = vmul.f32 %v2095, %v2116
  %v2127 = vmul.f32 %v2096, %v2116
  %v2128 = vmul.f32 %v2097, %v2116
  %v2129 = vmul.f32 %v2098, %v2116
  %v2130 = vmul.f32 %v2099, %v2116
  %v2131 = vmul.f32 %v2100, %v2116
  %v2132 = vmul.f32 %v2101, %v2116
  %v2133 = vmul.f32 %v2102, %v2116
  %v2134 = vmul.f32 %v2103, %v2116
  %v2135 = vmul.f32 %v2104, %v2116
  %v2136 = vmul.f32 %v2105, %v2116
  %v2137 = vmul.f32 %v2106, %v2116
  %v2138 = vmul.f32 %v2107, %v2116
  %v2139 = vmul.f32 %v2108, %v2116
  %v2140 = vmul.f32 %v2109, %v2116
  %v2141 = vmul.f32 %v2110, %v2116
  %v2142 = vmul.f32 %v2111, %v2116
  %v2144 = vlaneseq
  %v2145 = vshrl.u32 %v2144, 7
  %v2146 = vsub.s32 0, %v2145
  %v2147 = vrot.slane %v1784, %v2146
  %v2149 = vadd.f32 %v2118, %v2147
  %v2150 = vadd.f32 %v2119, %v2147
  %v2151 = vadd.f32 %v2120, %v2147
  %v2152 = vadd.f32 %v2121, %v2147
  %v2153 = vadd.f32 %v2122, %v2147
  %v2154 = vadd.f32 %v2123, %v2147
  %v2155 = vadd.f32 %v2124, %v2147
  %v2156 = vadd.f32 %v2125, %v2147
  %v2157 = vadd.f32 %v2126, %v2147
  %v2158 = vadd.f32 %v2127, %v2147
  %v2159 = vadd.f32 %v2128, %v2147
  %v2160 = vadd.f32 %v2129, %v2147
  %v2161 = vadd.f32 %v2130, %v2147
  %v2162 = vadd.f32 %v2131, %v2147
  %v2163 = vadd.f32 %v2132, %v2147
  %v2164 = vadd.f32 %v2133, %v2147
  %v2165 = vadd.f32 %v2134, %v2147
  %v2166 = vadd.f32 %v2135, %v2147
  %v2167 = vadd.f32 %v2136, %v2147
  %v2168 = vadd.f32 %v2137, %v2147
  %v2169 = vadd.f32 %v2138, %v2147
  %v2170 = vadd.f32 %v2139, %v2147
  %v2171 = vadd.f32 %v2140, %v2147
  %v2172 = vadd.f32 %v2141, %v2147
  %v2173 = vadd.f32 %v2142, %v2147
  %v2174 = vmax.f32 %v2149, 0.0
  %v2175 = vmax.f32 %v2150, 0.0
  %v2176 = vmax.f32 %v2151, 0.0
  %v2177 = vmax.f32 %v2152, 0.0
  %v2178 = vmax.f32 %v2153, 0.0
  %v2179 = vmax.f32 %v2154, 0.0
  %v2180 = vmax.f32 %v2155, 0.0
  %v2181 = vmax.f32 %v2156, 0.0
  %v2182 = vmax.f32 %v2157, 0.0
  %v2183 = vmax.f32 %v2158, 0.0
  %v2184 = vmax.f32 %v2159, 0.0
  %v2185 = vmax.f32 %v2160, 0.0
  %v2186 = vmax.f32 %v2161, 0.0
  %v2187 = vmax.f32 %v2162, 0.0
  %v2188 = vmax.f32 %v2163, 0.0
  %v2189 = vmax.f32 %v2164, 0.0
  %v2190 = vmax.f32 %v2165, 0.0
  %v2191 = vmax.f32 %v2166, 0.0
  %v2192 = vmax.f32 %v2167, 0.0
  %v2193 = vmax.f32 %v2168, 0.0
  %v2194 = vmax.f32 %v2169, 0.0
  %v2195 = vmax.f32 %v2170, 0.0
  %v2196 = vmax.f32 %v2171, 0.0
  %v2197 = vmax.f32 %v2172, 0.0
  %v2198 = vmax.f32 %v2173, 0.0
  %v2199 = vld [vmem:[%s11] sm:$0xf]
  %v2200 = vld [vmem:[%s12] sm:$0x1]
  %v2202 = vlaneseq
  %v2203 = vshrl.u32 %v2202, 7
  %v2204 = vsub.s32 0, %v2203
  %v2205 = vrot.slane %v2200, %v2204
  %v2208 = vsel %vm1785, %v2174, 0
  %v2211 = vsel %vm1785, %v2175, 0
  %v2214 = vsel %vm1785, %v2176, 0
  %v2217 = vsel %vm1785, %v2177, 0
  %v2220 = vsel %vm1785, %v2178, 0
  %v2223 = vsel %vm1785, %v2179, 0
  %v2226 = vsel %vm1785, %v2180, 0
  %v2229 = vsel %vm1785, %v2181, 0
  %v2232 = vsel %vm1785, %v2182, 0
  %v2235 = vsel %vm1785, %v2183, 0
  %v2238 = vsel %vm1785, %v2184, 0
  %v2241 = vsel %vm1785, %v2185, 0
  %v2244 = vsel %vm1785, %v2186, 0
  %v2247 = vsel %vm1785, %v2187, 0
  %v2250 = vsel %vm1785, %v2188, 0
  %v2253 = vsel %vm1785, %v2189, 0
  %v2256 = vsel %vm1785, %v2190, 0
  %v2259 = vsel %vm1785, %v2191, 0
  %v2262 = vsel %vm1785, %v2192, 0
  %v2265 = vsel %vm1785, %v2193, 0
  %v2268 = vsel %vm1785, %v2194, 0
  %v2271 = vsel %vm1785, %v2195, 0
  %v2274 = vsel %vm1785, %v2196, 0
  %v2277 = vsel %vm1785, %v2197, 0
  %v2280 = vsel %vm1785, %v2198, 0
  %vm2282 = vcmask 1043456
  %v2284 = vsel %vm2282, %v2199, 0
  %2286 = vmatprep.subr.mxu0 0.0
  %2287 = vmatpush1.msra.mxu0 %v2284
  %2288 = vmatprep.subr.mxu0 0.0
  %2289 = vmatpush1.msra.mxu0 0.0
  %2290 = vmatprep.subr.mxu0 0.0
  %2291 = vmatpush1.msra.mxu0 0.0
  %2292 = vmatprep.subr.mxu0 0.0
  %2293 = vmatpush1.msra.mxu0 0.0
  %2294 = vmatprep.subr.mxu0 0.0
  %2295 = vmatpush1.msra.mxu0 0.0
  %2296 = vmatprep.subr.mxu0 0.0
  %2297 = vmatpush1.msra.mxu0 0.0
  %2298 = vmatprep.subr.mxu0 0.0
  %2299 = vmatpush1.msra.mxu0 0.0
  %2300 = vmatprep.subr.mxu0 0.0
  %2301 = vmatpush1.msra.mxu0 0.0
  %2302 = vmatprep.subr.mxu0 0.0
  %2303 = vmatpush1.msra.mxu0 0.0
  %2304 = vmatprep.subr.mxu0 0.0
  %2305 = vmatpush1.msra.mxu0 0.0
  %2306 = vmatprep.subr.mxu0 0.0
  %2307 = vmatpush1.msra.mxu0 0.0
  %2308 = vmatprep.subr.mxu0 0.0
  %2309 = vmatpush1.msra.mxu0 0.0
  %2310 = vmatprep.subr.mxu0 0.0
  %2311 = vmatpush1.msra.mxu0 0.0
  %2312 = vmatprep.subr.mxu0 0.0
  %2313 = vmatpush1.msra.mxu0 0.0
  %2314 = vmatprep.subr.mxu0 0.0
  %2315 = vmatpush1.msra.mxu0 0.0
  %2316 = vmatprep.subr.mxu0 0.0
  %2317 = vmatpush1.msra.mxu0 0.0
  %2318 = vmatprep.subr.mxu0 0.0
  %2319 = vmatpush1.msra.mxu0 0.0
  %2320 = vmatprep.subr.mxu0 0.0
  %2321 = vmatpush1.msra.mxu0 0.0
  %2322 = vmatprep.subr.mxu0 0.0
  %2323 = vmatpush1.msra.mxu0 0.0
  %2324 = vmatprep.subr.mxu0 0.0
  %2325 = vmatpush1.msra.mxu0 0.0
  %2326 = vmatprep.subr.mxu0 0.0
  %2327 = vmatpush1.msra.mxu0 0.0
  %2328 = vmatprep.subr.mxu0 0.0
  %2329 = vmatpush1.msra.mxu0 0.0
  %2330 = vmatprep.subr.mxu0 0.0
  %2331 = vmatpush1.msra.mxu0 0.0
  %2332 = vmatprep.subr.mxu0 0.0
  %2333 = vmatpush1.msra.mxu0 0.0
  %2334 = vmatprep.subr.mxu0 0.0
  %2335 = vmatpush1.msra.mxu0 0.0
  %2336 = vmatprep.subr.mxu0 0.0
  %2337 = vmatpush1.msra.mxu0 0.0
  %2338 = vmatprep.subr.mxu0 0.0
  %2339 = vmatpush1.msra.mxu0 0.0
  %2340 = vmatprep.subr.mxu0 0.0
  %2341 = vmatpush1.msra.mxu0 0.0
  %2342 = vmatprep.subr.mxu0 0.0
  %2343 = vmatpush1.msra.mxu0 0.0
  %2344 = vmatprep.subr.mxu0 0.0
  %2345 = vmatpush1.msra.mxu0 0.0
  %2346 = vmatprep.subr.mxu0 0.0
  %2347 = vmatpush1.msra.mxu0 0.0
  %2348 = vmatprep.subr.mxu0 0.0
  %2349 = vmatpush1.msra.mxu0 0.0
  %2350 = vmatprep.mubr.f32.mxu0 0.0
  %2351 = vmatmul.mubr.f32.gmra.mrb[0].mxu0 %v2208
  %v2352 = vpop.f32.mrb[0].mxu0
  %v2353 = vadd.f32 %v2205, %v2352
  %v2354 = vpop.f32.mrb[0].mxu0
  %2355 = vmatprep.mubr.f32.mxu0 0.0
  %2356 = vmatmul.mubr.f32.gmra.mrb[0].mxu0 %v2211
  %v2357 = vpop.f32.mrb[0].mxu0
  %v2358 = vadd.f32 %v2205, %v2357
  %v2359 = vpop.f32.mrb[0].mxu0
  %2360 = vmatprep.mubr.f32.mxu0 0.0
  %2361 = vmatmul.mubr.f32.gmra.mrb[0].mxu0 %v2214
  %v2362 = vpop.f32.mrb[0].mxu0
  %v2363 = vadd.f32 %v2205, %v2362
  %v2364 = vpop.f32.mrb[0].mxu0
  %2365 = vmatprep.mubr.f32.mxu0 0.0
  %2366 = vmatmul.mubr.f32.gmra.mrb[0].mxu0 %v2217
  %v2367 = vpop.f32.mrb[0].mxu0
  %v2368 = vadd.f32 %v2205, %v2367
  %v2369 = vpop.f32.mrb[0].mxu0
  %2370 = vmatprep.mubr.f32.mxu0 0.0
  %2371 = vmatmul.mubr.f32.gmra.mrb[0].mxu0 %v2220
  %v2372 = vpop.f32.mrb[0].mxu0
  %v2373 = vadd.f32 %v2205, %v2372
  %v2374 = vpop.f32.mrb[0].mxu0
  %2375 = vmatprep.mubr.f32.mxu0 0.0
  %2376 = vmatmul.mubr.f32.gmra.mrb[0].mxu0 %v2223
  %v2377 = vpop.f32.mrb[0].mxu0
  %v2378 = vadd.f32 %v2205, %v2377
  %v2379 = vpop.f32.mrb[0].mxu0
  %2380 = vmatprep.mubr.f32.mxu0 0.0
  %2381 = vmatmul.mubr.f32.gmra.mrb[0].mxu0 %v2226
  %v2382 = vpop.f32.mrb[0].mxu0
  %v2383 = vadd.f32 %v2205, %v2382
  %v2384 = vpop.f32.mrb[0].mxu0
  %2385 = vmatprep.mubr.f32.mxu0 0.0
  %2386 = vmatmul.mubr.f32.gmra.mrb[0].mxu0 %v2229
  %v2387 = vpop.f32.mrb[0].mxu0
  %v2388 = vadd.f32 %v2205, %v2387
  %v2389 = vpop.f32.mrb[0].mxu0
  %2390 = vmatprep.mubr.f32.mxu0 0.0
  %2391 = vmatmul.mubr.f32.gmra.mrb[0].mxu0 %v2232
  %v2392 = vpop.f32.mrb[0].mxu0
  %v2393 = vadd.f32 %v2205, %v2392
  %v2394 = vpop.f32.mrb[0].mxu0
  %2395 = vmatprep.mubr.f32.mxu0 0.0
  %2396 = vmatmul.mubr.f32.gmra.mrb[0].mxu0 %v2235
  %v2397 = vpop.f32.mrb[0].mxu0
  %v2398 = vadd.f32 %v2205, %v2397
  %v2399 = vpop.f32.mrb[0].mxu0
  %2400 = vmatprep.mubr.f32.mxu0 0.0
  %2401 = vmatmul.mubr.f32.gmra.mrb[0].mxu0 %v2238
  %v2402 = vpop.f32.mrb[0].mxu0
  %v2403 = vadd.f32 %v2205, %v2402
  %v2404 = vpop.f32.mrb[0].mxu0
  %2405 = vmatprep.mubr.f32.mxu0 0.0
  %2406 = vmatmul.mubr.f32.gmra.mrb[0].mxu0 %v2241
  %v2407 = vpop.f32.mrb[0].mxu0
  %v2408 = vadd.f32 %v2205, %v2407
  %v2409 = vpop.f32.mrb[0].mxu0
  %2410 = vmatprep.mubr.f32.mxu0 0.0
  %2411 = vmatmul.mubr.f32.gmra.mrb[0].mxu0 %v2244
  %v2412 = vpop.f32.mrb[0].mxu0
  %v2413 = vadd.f32 %v2205, %v2412
  %v2414 = vpop.f32.mrb[0].mxu0
  %2415 = vmatprep.mubr.f32.mxu0 0.0
  %2416 = vmatmul.mubr.f32.gmra.mrb[0].mxu0 %v2247
  %v2417 = vpop.f32.mrb[0].mxu0
  %v2418 = vadd.f32 %v2205, %v2417
  %v2419 = vpop.f32.mrb[0].mxu0
  %2420 = vmatprep.mubr.f32.mxu0 0.0
  %2421 = vmatmul.mubr.f32.gmra.mrb[0].mxu0 %v2250
  %v2422 = vpop.f32.mrb[0].mxu0
  %v2423 = vadd.f32 %v2205, %v2422
  %v2424 = vpop.f32.mrb[0].mxu0
  %2425 = vmatprep.mubr.f32.mxu0 0.0
  %2426 = vmatmul.mubr.f32.gmra.mrb[0].mxu0 %v2253
  %v2427 = vpop.f32.mrb[0].mxu0
  %v2428 = vadd.f32 %v2205, %v2427
  %v2429 = vpop.f32.mrb[0].mxu0
  %2430 = vmatprep.mubr.f32.mxu0 0.0
  %2431 = vmatmul.mubr.f32.gmra.mrb[0].mxu0 %v2256
  %v2432 = vpop.f32.mrb[0].mxu0
  %v2433 = vadd.f32 %v2205, %v2432
  %v2434 = vpop.f32.mrb[0].mxu0
  %2435 = vmatprep.mubr.f32.mxu0 0.0
  %2436 = vmatmul.mubr.f32.gmra.mrb[0].mxu0 %v2259
  %v2437 = vpop.f32.mrb[0].mxu0
  %v2438 = vadd.f32 %v2205, %v2437
  %v2439 = vpop.f32.mrb[0].mxu0
  %2440 = vmatprep.mubr.f32.mxu0 0.0
  %2441 = vmatmul.mubr.f32.gmra.mrb[0].mxu0 %v2262
  %v2442 = vpop.f32.mrb[0].mxu0
  %v2443 = vadd.f32 %v2205, %v2442
  %v2444 = vpop.f32.mrb[0].mxu0
  %2445 = vmatprep.mubr.f32.mxu0 0.0
  %2446 = vmatmul.mubr.f32.gmra.mrb[0].mxu0 %v2265
  %v2447 = vpop.f32.mrb[0].mxu0
  %v2448 = vadd.f32 %v2205, %v2447
  %v2449 = vpop.f32.mrb[0].mxu0
  %2450 = vmatprep.mubr.f32.mxu0 0.0
  %2451 = vmatmul.mubr.f32.gmra.mrb[0].mxu0 %v2268
  %v2452 = vpop.f32.mrb[0].mxu0
  %v2453 = vadd.f32 %v2205, %v2452
  %v2454 = vpop.f32.mrb[0].mxu0
  %2455 = vmatprep.mubr.f32.mxu0 0.0
  %2456 = vmatmul.mubr.f32.gmra.mrb[0].mxu0 %v2271
  %v2457 = vpop.f32.mrb[0].mxu0
  %v2458 = vadd.f32 %v2205, %v2457
  %v2459 = vpop.f32.mrb[0].mxu0
  %2460 = vmatprep.mubr.f32.mxu0 0.0
  %2461 = vmatmul.mubr.f32.gmra.mrb[0].mxu0 %v2274
  %v2462 = vpop.f32.mrb[0].mxu0
  %v2463 = vadd.f32 %v2205, %v2462
  %v2464 = vpop.f32.mrb[0].mxu0
  %2465 = vmatprep.mubr.f32.mxu0 0.0
  %2466 = vmatmul.mubr.f32.gmra.mrb[0].mxu0 %v2277
  %v2467 = vpop.f32.mrb[0].mxu0
  %v2468 = vadd.f32 %v2205, %v2467
  %v2469 = vpop.f32.mrb[0].mxu0
  %2470 = vmatprep.mubr.f32.mxu0 0.0
  %2471 = vmatmul.mubr.f32.gmra.mrb[0].mxu0 %v2280
  %v2472 = vpop.f32.mrb[0].mxu0
  %v2473 = vadd.f32 %v2205, %v2472
  %v2474 = vpop.f32.mrb[0].mxu0
  %2475 = vdwg.mxu0
  %2476 = vst [vmem:[%s13] sm:$0xff] %v2353
  %2477 = vst [vmem:[%s13 + $0x8] sm:$0xff] %v2358
  %2478 = vst [vmem:[%s13 + $0x10] sm:$0xff] %v2363
  %2479 = vst [vmem:[%s13 + $0x18] sm:$0xff] %v2368
  %2480 = vst [vmem:[%s13 + $0x20] sm:$0xff] %v2373
  %2481 = vst [vmem:[%s13 + $0x28] sm:$0xff] %v2378
  %2482 = vst [vmem:[%s13 + $0x30] sm:$0xff] %v2383
  %2483 = vst [vmem:[%s13 + $0x38] sm:$0xff] %v2388
  %2484 = vst [vmem:[%s13 + $0x40] sm:$0xff] %v2393
  %2485 = vst [vmem:[%s13 + $0x48] sm:$0xff] %v2398
  %2486 = vst [vmem:[%s13 + $0x50] sm:$0xff] %v2403
  %2487 = vst [vmem:[%s13 + $0x58] sm:$0xff] %v2408
  %2488 = vst [vmem:[%s13 + $0x60] sm:$0xff] %v2413
  %2489 = vst [vmem:[%s13 + $0x68] sm:$0xff] %v2418
  %2490 = vst [vmem:[%s13 + $0x70] sm:$0xff] %v2423
  %2491 = vst [vmem:[%s13 + $0x78] sm:$0xff] %v2428
  %2492 = vst [vmem:[%s13 + $0x80] sm:$0xff] %v2433
  %2493 = vst [vmem:[%s13 + $0x88] sm:$0xff] %v2438
  %2494 = vst [vmem:[%s13 + $0x90] sm:$0xff] %v2443
  %2495 = vst [vmem:[%s13 + $0x98] sm:$0xff] %v2448
  %2496 = vst [vmem:[%s13 + $0xa0] sm:$0xff] %v2453
  %2497 = vst [vmem:[%s13 + $0xa8] sm:$0xff] %v2458
  %2498 = vst [vmem:[%s13 + $0xb0] sm:$0xff] %v2463
  %2499 = vst [vmem:[%s13 + $0xb8] sm:$0xff] %v2468
  %2500 = vst [vmem:[%s13 + $0xc0] sm:$0xff] %v2473
  // Predicated region
  $region54: #{seffnet_forward.1} parent=0 // pred_check
    _
  $region55: #{seffnet_forward.1} parent=0 // pred_check_branch
    %2502 = sbr.rel (0) target = $region57
  $region56: #{seffnet_forward.1} parent=0 // pred_region
    _
  $region57: #{seffnet_forward.1} parent=0 // pred_fallthru
    _
  // Predicated region
  $region58: #{seffnet_forward.1} parent=0 // pred_check
    _
  $region59: #{seffnet_forward.1} parent=0 // pred_check_branch
    %2504 = sbr.rel (0) target = $region61
  $region60: #{seffnet_forward.1} parent=0 // pred_region
    _
  $region61: #{seffnet_forward.1} parent=0 // pred_fallthru
    _

</llo_original>
